<compile_context>
chip_gen: v6e
topology: v6e:2x2x1
jax: 0.10.0
libtpu: 0.0.40
codegen_flags: <defaults>
</compile_context>

<pallas_src>
import functools

import jax
import jax.numpy as jnp
from jax.experimental import pallas as pl
from jax.experimental.pallas import tpu as pltpu


def _round_up(x, m):
    return (x + m - 1) // m * m


def _generator_kernel(x_ref,
                      w2_ref, b2_ref,
                      w3_ref, b3_ref,
                      w4_ref, b4_ref,
                      w5_ref, b5_ref,
                      out_ref):
    """Fused layers 2..5 of the generator MLP for one batch tile.

    x_ref  : (TB, 128) bf16 activations (layer-1 output, computed in wrapper)
    w*_ref : bf16 weights (full blocks, VMEM-resident, single-buffered)
    b*_ref : f32 biases (1, N)
    out_ref: (TB, out_padded) output tile
    """

    def layer(x_bf16, w_ref, b_ref):
        # bf16 x bf16 on the MXU, f32 accumulate, f32 bias add, then a single
        # cast back to bf16 and leaky-ReLU in bf16 (fewer casts / less vreg
        # traffic on the wide elementwise stages; works on all generations).
        h = jnp.dot(x_bf16, w_ref[...],
                    preferred_element_type=jnp.float32) + b_ref[...]
        h = h.astype(jnp.bfloat16)
        return jnp.maximum(h, 0.2 * h)

    x = x_ref[...]                       # (TB, 128)   bf16
    x = layer(x, w2_ref, b2_ref)         # (TB, 256)
    x = layer(x, w3_ref, b3_ref)         # (TB, 512)
    x = layer(x, w4_ref, b4_ref)         # (TB, 1024)

    # Output layer: matmul -> bias -> tanh (EUP) in f32, single cast on store.
    h = jnp.dot(x, w5_ref[...],
                preferred_element_type=jnp.float32) + b5_ref[...]
    out_ref[...] = jnp.tanh(h).astype(out_ref.dtype)


def generator_forward(z, params, *, batch_tile=256, out_dtype=jnp.float32):
    """z: (B, 1) float32.  params: flat tuple (w1,b1,...,w5,b5).

    w1 and all biases are f32; w2..w5 are bf16 (MXU operands).
    Numerics intentionally use bf16 matmul operands / bf16 leaky-ReLU with
    f32 accumulation, so results differ from a pure-f32 torch reference at
    the ~1e-2 level.
    """
    w1, b1, w2, b2, w3, b3, w4, b4, w5, b5 = params
    batch = z.shape[0]
    out_features = w5.shape[1]

    # ---- layer 1 hoisted out of the kernel --------------------------------
    # (B,1)x(1,128) is a degenerate, lane-sparse matmul; doing it as a plain
    # XLA broadcast lets the kernel consume a lane-dense bf16 (B,128) input.
    z = z.astype(jnp.float32)
    x1 = z * w1 + b1
    x1 = jnp.maximum(x1, 0.2 * x1).astype(jnp.bfloat16)      # (B, 128)

    # ---- pad output features to a lane-dense multiple of 128 --------------
    out_padded = _round_up(out_features, 128)
    if out_padded != out_features:
        pad_n = out_padded - out_features
        w5 = jnp.pad(w5, ((0, 0), (0, pad_n)))
        b5 = jnp.pad(b5, ((0, 0), (0, pad_n)))

    # ---- batch tiling (tile clamped to a multiple of the 8-sublane unit) --
    batch_tile = max(8, _round_up(int(batch_tile), 8))
    padded_batch = _round_up(batch, 8)
    tb = min(batch_tile, padded_batch)
    padded_batch = _round_up(padded_batch, tb)
    if padded_batch != batch:
        x1 = jnp.pad(x1, ((0, padded_batch - batch), (0, 0)))
    num_tiles = padded_batch // tb

    weights = (w2, b2, w3, b3, w4, b4, w5, b5)

    # Streamed activations: default double-buffered per-tile blocks.
    x_spec = pl.BlockSpec((tb, 128), lambda i: (i, 0))
    out_spec = pl.BlockSpec((tb, out_padded), lambda i: (i, 0))
    # Grid-invariant weight/bias blocks: constant index_map keeps them
    # VMEM-resident across grid steps; Buffered(1) drops the useless second
    # buffer and halves their VMEM footprint.
    weight_specs = [
        pl.BlockSpec(w.shape, lambda i: (0, 0), pipeline_mode=pl.Buffered(1))
        for w in weights
    ]

    # ---- explicit VMEM budget (scoped defaults are 16/32 MiB) -------------
    out_itemsize = jnp.dtype(out_dtype).itemsize
    weight_bytes = sum(int(w.size) * w.dtype.itemsize for w in weights)
    stream_bytes = 2 * (tb * 128 * 2 + tb * out_padded * out_itemsize)
    act_bytes = tb * (256 + 512 + 1024 + 2 * out_padded) * 4
    vmem_limit = int(1.5 * (weight_bytes + stream_bytes + act_bytes)) + (4 << 20)
    vmem_limit = max(32 << 20, min(64 << 20, vmem_limit))   # safe on v5e/v6e/v7x

    # Advisory cost estimate (layers 2..5) so XLA schedules around this call.
    dims = [(w2.shape[0], w2.shape[1]), (w3.shape[0], w3.shape[1]),
            (w4.shape[0], w4.shape[1]), (w5.shape[0], w5.shape[1])]
    flops = 2 * padded_batch * sum(i * o for i, o in dims)
    bytes_accessed = (weight_bytes + padded_batch * 128 * 2
                      + padded_batch * out_padded * out_itemsize)
    cost = pl.CostEstimate(flops=flops,
                           transcendentals=padded_batch * out_padded,
                           bytes_accessed=bytes_accessed)

    fn = pl.pallas_call(
        _generator_kernel,
        out_shape=jax.ShapeDtypeStruct((padded_batch, out_padded), out_dtype),
        grid=(num_tiles,),
        in_specs=[x_spec] + weight_specs,
        out_specs=out_spec,
        compiler_params=pltpu.CompilerParams(
            # With a single tile, sharding the grid across v7x's 2 TCs only
            # duplicates the weight DMA; mark parallel only with real work.
            dimension_semantics=(
                ("parallel",) if num_tiles >= 2 else ("arbitrary",)),
            vmem_limit_bytes=vmem_limit,
        ),
        cost_estimate=cost,
    )
    img = fn(x1, *weights)

    # Strip padding; PyTorch: img.view(img.size(0), -1) — already 2D.
    img = img[:batch, :out_features]
    return img.reshape(batch, -1)


def init_generator_params(key, input_size):
    """Deterministic synthetic init matching the module's layer shapes.

    Weights of the 4 big matmuls are stored in bf16 (MXU operands); the
    tiny first-layer row and all biases stay f32.
    """
    dims = [1, 128, 256, 512, 1024, int(input_size)]
    params = []
    for i in range(len(dims) - 1):
        key, kw, kb = jax.random.split(key, 3)
        fan_in = dims[i]
        bound = 1.0 / (fan_in ** 0.5)  # PyTorch Linear default scale
        w = jax.random.uniform(kw, (dims[i], dims[i + 1]),
                               minval=-bound, maxval=bound, dtype=jnp.float32)
        b = jax.random.uniform(kb, (1, dims[i + 1]),
                               minval=-bound, maxval=bound, dtype=jnp.float32)
        if i > 0:  # bf16 weights for the MXU layers
            w = w.astype(jnp.bfloat16)
        params.extend([w, b])
    return tuple(params)


def generator_reference(z, params):
    """Pure-JAX reference with identical numerics (bf16 operands / bf16
    leaky-ReLU, f32 accumulation) for a tight correctness check."""
    w1, b1, w2, b2, w3, b3, w4, b4, w5, b5 = params

    z = z.astype(jnp.float32)
    x = z * w1 + b1
    x = jnp.maximum(x, 0.2 * x).astype(jnp.bfloat16)

    def layer(x, w, b):
        h = jnp.dot(x, w, preferred_element_type=jnp.float32) + b
        h = h.astype(jnp.bfloat16)
        return jnp.maximum(h, 0.2 * h)

    x = layer(x, w2, b2)
    x = layer(x, w3, b3)
    x = layer(x, w4, b4)
    h = jnp.dot(x, w5, preferred_element_type=jnp.float32) + b5
    return jnp.tanh(h).reshape(z.shape[0], -1)


if __name__ == "__main__":
    key = jax.random.PRNGKey(0)
    k_params, k_z = jax.random.split(key)

    input_size = 64   # e.g. an 8x8 "image" flattened
    batch = 8

    params = init_generator_params(k_params, input_size)
    z = jax.random.normal(k_z, (batch, 1), dtype=jnp.float32)

    img = generator_forward(z, params)
    img = jax.block_until_ready(img)

    ref = generator_reference(z, params)
    assert img.shape == (batch, input_size), img.shape
    assert jnp.allclose(img, ref, rtol=1e-2, atol=1e-2), "mismatch vs reference"

    print("KERNEL_OK")
</pallas_src>

<mosaic_0001>
module attributes {stable_mosaic.version = 11 : i64} {
  func.func @_generator_kernel(%arg0: i32, %arg1: memref<8x128xbf16, #tpu.memory_space<vmem>>, %arg2: memref<128x256xbf16, #tpu.memory_space<vmem>>, %arg3: memref<1x256xf32, #tpu.memory_space<vmem>>, %arg4: memref<256x512xbf16, #tpu.memory_space<vmem>>, %arg5: memref<1x512xf32, #tpu.memory_space<vmem>>, %arg6: memref<512x1024xbf16, #tpu.memory_space<vmem>>, %arg7: memref<1x1024xf32, #tpu.memory_space<vmem>>, %arg8: memref<1024x128xbf16, #tpu.memory_space<vmem>>, %arg9: memref<1x128xf32, #tpu.memory_space<vmem>>, %arg10: memref<8x128xf32, #tpu.memory_space<vmem>>) attributes {dimension_semantics = [#tpu.dimension_semantics<arbitrary>], iteration_bounds = array<i64: 1>, scalar_prefetch = 0 : i64, scratch_operands = 0 : i64, tpu.core_type = #tpu.core_type<tc>, window_params = [{transform_indices = @transform_0, window_bounds = array<i64: 8, 128>}, {pipeline_mode = #tpu.pipeline_mode<synchronous>, transform_indices = @transform_1, window_bounds = array<i64: 128, 256>}, {pipeline_mode = #tpu.pipeline_mode<synchronous>, transform_indices = @transform_2, window_bounds = array<i64: 1, 256>}, {pipeline_mode = #tpu.pipeline_mode<synchronous>, transform_indices = @transform_3, window_bounds = array<i64: 256, 512>}, {pipeline_mode = #tpu.pipeline_mode<synchronous>, transform_indices = @transform_4, window_bounds = array<i64: 1, 512>}, {pipeline_mode = #tpu.pipeline_mode<synchronous>, transform_indices = @transform_5, window_bounds = array<i64: 512, 1024>}, {pipeline_mode = #tpu.pipeline_mode<synchronous>, transform_indices = @transform_6, window_bounds = array<i64: 1, 1024>}, {pipeline_mode = #tpu.pipeline_mode<synchronous>, transform_indices = @transform_7, window_bounds = array<i64: 1024, 128>}, {pipeline_mode = #tpu.pipeline_mode<synchronous>, transform_indices = @transform_8, window_bounds = array<i64: 1, 128>}, {transform_indices = @transform_9, window_bounds = array<i64: 8, 128>}]} {
    %c0 = arith.constant 0 : index
    %c0_0 = arith.constant 0 : index
    %0 = vector.load %arg1[%c0, %c0_0] : memref<8x128xbf16, #tpu.memory_space<vmem>>, vector<8x128xbf16>
    %c0_1 = arith.constant 0 : index
    %c0_2 = arith.constant 0 : index
    %1 = vector.load %arg2[%c0_1, %c0_2] : memref<128x256xbf16, #tpu.memory_space<vmem>>, vector<128x256xbf16>
    %cst = arith.constant dense<0.000000e+00> : vector<8x256xf32>
    %2 = tpu.matmul %0, %1, %cst {dimension_numbers = #tpu.dot_dimension_numbers<[1], [0], [0], [1], [0, 0, 1, 1], [], []>} : vector<8x128xbf16>, vector<128x256xbf16>, vector<8x256xf32> -> vector<8x256xf32>
    %c0_3 = arith.constant 0 : index
    %c0_4 = arith.constant 0 : index
    %3 = vector.load %arg3[%c0_3, %c0_4] : memref<1x256xf32, #tpu.memory_space<vmem>>, vector<1x256xf32>
    %4 = vector.broadcast %3 : vector<1x256xf32> to vector<8x256xf32>
    %5 = arith.addf %2, %4 : vector<8x256xf32>
    %6 = arith.truncf %5 : vector<8x256xf32> to vector<8x256xbf16>
    %cst_5 = arith.constant 2.001950e-01 : bf16
    %7 = vector.broadcast %cst_5 : bf16 to vector<8x256xbf16>
    %8 = arith.mulf %7, %6 : vector<8x256xbf16>
    %9 = arith.maximumf %6, %8 : vector<8x256xbf16>
    %c0_6 = arith.constant 0 : index
    %c0_7 = arith.constant 0 : index
    %10 = vector.load %arg4[%c0_6, %c0_7] : memref<256x512xbf16, #tpu.memory_space<vmem>>, vector<256x512xbf16>
    %cst_8 = arith.constant dense<0.000000e+00> : vector<8x512xf32>
    %11 = tpu.matmul %9, %10, %cst_8 {dimension_numbers = #tpu.dot_dimension_numbers<[1], [0], [0], [1], [0, 0, 1, 1], [], []>} : vector<8x256xbf16>, vector<256x512xbf16>, vector<8x512xf32> -> vector<8x512xf32>
    %c0_9 = arith.constant 0 : index
    %c0_10 = arith.constant 0 : index
    %12 = vector.load %arg5[%c0_9, %c0_10] : memref<1x512xf32, #tpu.memory_space<vmem>>, vector<1x512xf32>
    %13 = vector.broadcast %12 : vector<1x512xf32> to vector<8x512xf32>
    %14 = arith.addf %11, %13 : vector<8x512xf32>
    %15 = arith.truncf %14 : vector<8x512xf32> to vector<8x512xbf16>
    %cst_11 = arith.constant 2.001950e-01 : bf16
    %16 = vector.broadcast %cst_11 : bf16 to vector<8x512xbf16>
    %17 = arith.mulf %16, %15 : vector<8x512xbf16>
    %18 = arith.maximumf %15, %17 : vector<8x512xbf16>
    %c0_12 = arith.constant 0 : index
    %c0_13 = arith.constant 0 : index
    %19 = vector.load %arg6[%c0_12, %c0_13] : memref<512x1024xbf16, #tpu.memory_space<vmem>>, vector<512x1024xbf16>
    %cst_14 = arith.constant dense<0.000000e+00> : vector<8x1024xf32>
    %20 = tpu.matmul %18, %19, %cst_14 {dimension_numbers = #tpu.dot_dimension_numbers<[1], [0], [0], [1], [0, 0, 1, 1], [], []>} : vector<8x512xbf16>, vector<512x1024xbf16>, vector<8x1024xf32> -> vector<8x1024xf32>
    %c0_15 = arith.constant 0 : index
    %c0_16 = arith.constant 0 : index
    %21 = vector.load %arg7[%c0_15, %c0_16] : memref<1x1024xf32, #tpu.memory_space<vmem>>, vector<1x1024xf32>
    %22 = vector.broadcast %21 : vector<1x1024xf32> to vector<8x1024xf32>
    %23 = arith.addf %20, %22 : vector<8x1024xf32>
    %24 = arith.truncf %23 : vector<8x1024xf32> to vector<8x1024xbf16>
    %cst_17 = arith.constant 2.001950e-01 : bf16
    %25 = vector.broadcast %cst_17 : bf16 to vector<8x1024xbf16>
    %26 = arith.mulf %25, %24 : vector<8x1024xbf16>
    %27 = arith.maximumf %24, %26 : vector<8x1024xbf16>
    %c0_18 = arith.constant 0 : index
    %c0_19 = arith.constant 0 : index
    %28 = vector.load %arg8[%c0_18, %c0_19] : memref<1024x128xbf16, #tpu.memory_space<vmem>>, vector<1024x128xbf16>
    %cst_20 = arith.constant dense<0.000000e+00> : vector<8x128xf32>
    %29 = tpu.matmul %27, %28, %cst_20 {dimension_numbers = #tpu.dot_dimension_numbers<[1], [0], [0], [1], [0, 0, 1, 1], [], []>} : vector<8x1024xbf16>, vector<1024x128xbf16>, vector<8x128xf32> -> vector<8x128xf32>
    %c0_21 = arith.constant 0 : index
    %c0_22 = arith.constant 0 : index
    %30 = vector.load %arg9[%c0_21, %c0_22] : memref<1x128xf32, #tpu.memory_space<vmem>>, vector<1x128xf32>
    %31 = vector.broadcast %30 : vector<1x128xf32> to vector<8x128xf32>
    %32 = arith.addf %29, %31 : vector<8x128xf32>
    %33 = math.tanh %32 : vector<8x128xf32>
    %c0_23 = arith.constant 0 : index
    %c0_24 = arith.constant 0 : index
    %34 = vector.load %arg10[%c0_23, %c0_24] : memref<8x128xf32, #tpu.memory_space<vmem>>, vector<8x128xf32>
    tpu.vector_store %arg10[%c0_23, %c0_24], %33 {strides = array<i32>} : memref<8x128xf32, #tpu.memory_space<vmem>>, vector<8x128xf32>,
    return
  }
  func.func @transform_0(%arg0: i32) -> (i32, i32) {
    %c0_i32 = arith.constant 0 : i32
    %c0_i32_0 = arith.constant 0 : i32
    return %arg0, %c0_i32 : i32, i32
  }
  func.func @transform_1(%arg0: i32) -> (i32, i32) {
    %c0_i32 = arith.constant 0 : i32
    %c0_i32_0 = arith.constant 0 : i32
    %c0_i32_1 = arith.constant 0 : i32
    return %c0_i32, %c0_i32_0 : i32, i32
  }
  func.func @transform_2(%arg0: i32) -> (i32, i32) {
    %c0_i32 = arith.constant 0 : i32
    %c0_i32_0 = arith.constant 0 : i32
    %c0_i32_1 = arith.constant 0 : i32
    return %c0_i32, %c0_i32_0 : i32, i32
  }
  func.func @transform_3(%arg0: i32) -> (i32, i32) {
    %c0_i32 = arith.constant 0 : i32
    %c0_i32_0 = arith.constant 0 : i32
    %c0_i32_1 = arith.constant 0 : i32
    return %c0_i32, %c0_i32_0 : i32, i32
  }
  func.func @transform_4(%arg0: i32) -> (i32, i32) {
    %c0_i32 = arith.constant 0 : i32
    %c0_i32_0 = arith.constant 0 : i32
    %c0_i32_1 = arith.constant 0 : i32
    return %c0_i32, %c0_i32_0 : i32, i32
  }
  func.func @transform_5(%arg0: i32) -> (i32, i32) {
    %c0_i32 = arith.constant 0 : i32
    %c0_i32_0 = arith.constant 0 : i32
    %c0_i32_1 = arith.constant 0 : i32
    return %c0_i32, %c0_i32_0 : i32, i32
  }
  func.func @transform_6(%arg0: i32) -> (i32, i32) {
    %c0_i32 = arith.constant 0 : i32
    %c0_i32_0 = arith.constant 0 : i32
    %c0_i32_1 = arith.constant 0 : i32
    return %c0_i32, %c0_i32_0 : i32, i32
  }
  func.func @transform_7(%arg0: i32) -> (i32, i32) {
    %c0_i32 = arith.constant 0 : i32
    %c0_i32_0 = arith.constant 0 : i32
    %c0_i32_1 = arith.constant 0 : i32
    return %c0_i32, %c0_i32_0 : i32, i32
  }
  func.func @transform_8(%arg0: i32) -> (i32, i32) {
    %c0_i32 = arith.constant 0 : i32
    %c0_i32_0 = arith.constant 0 : i32
    %c0_i32_1 = arith.constant 0 : i32
    return %c0_i32, %c0_i32_0 : i32, i32
  }
  func.func @transform_9(%arg0: i32) -> (i32, i32) {
    %c0_i32 = arith.constant 0 : i32
    %c0_i32_0 = arith.constant 0 : i32
    return %arg0, %c0_i32 : i32, i32
  }
}

</mosaic_0001>

<llo_original>
// kernel: tpu_custom_call.1
$region0: #{tpu_custom_call.1}
  #allocation0 [shape = 'u32[]', space=smem, size = 0x4, offset = 0x4, fixed_abs, tag = 'smem constant byte address 0x4 - core index']
  #allocation1 [shape = 'u32[144,128]{1,0:T(1,128)}', space=vmem, size = 0x12000, scoped, tag = 'internal scratch']
  %s0 = inlined_call_operand.hbm [shape: bf16[8,128], index: 0, kind: input, shape index: {}]
  %s1 = inlined_call_operand.hbm [shape: bf16[128,256], index: 1, kind: input, shape index: {}]
  %s2 = inlined_call_operand.vmem [shape: f32[1,256], index: 2, kind: input, shape index: {}]
  %s3 = inlined_call_operand.hbm [shape: bf16[256,512], index: 3, kind: input, shape index: {}]
  %s4 = inlined_call_operand.hbm [shape: f32[1,512], index: 4, kind: input, shape index: {}]
  %s5 = inlined_call_operand.hbm [shape: bf16[512,1024], index: 5, kind: input, shape index: {}]
  %s6 = inlined_call_operand.vmem [shape: f32[1,1024], index: 6, kind: input, shape index: {}]
  %s7 = inlined_call_operand.hbm [shape: bf16[1024,128], index: 7, kind: input, shape index: {}]
  %s8 = inlined_call_operand.vmem [shape: f32[1,128], index: 8, kind: input, shape index: {}]
  %s9 = inlined_call_operand.hbm [shape: f32[8,128], index: 9, kind: output, shape index: {}]
  %s10 = sld [smem:[#allocation0]]
  $region70: #{tpu_custom_call.1} parent=0
    _
  %s12 = ssub.s32 1, %s10
  %s13 = scalar_select 0, %s12, %s10
  $region1: #{tpu_custom_call.1} parent=0
    #allocation2 [shape = 'u8[2048]{0}', space=vmem, size = 0x800, scoped, tag = 'input window, operand 0, single buffered']
    #allocation3 [shape = 's32[1]{0}', space=sflag, size = 0x4, scoped, tag = 'scoped memory for tpu_custom_call.1']
    #allocation4 [shape = 's32[1]{0}', space=sflag, size = 0x4, scoped, tag = 'scoped memory for tpu_custom_call.1']
    #allocation5 [shape = 'u8[65536]{0}', space=vmem, size = 0x10000, scoped, tag = 'input window, operand 1, single buffered']
    #allocation6 [shape = 's32[1]{0}', space=sflag, size = 0x4, scoped, tag = 'scoped memory for tpu_custom_call.1']
    #allocation7 [shape = 'u8[262144]{0}', space=vmem, size = 0x40000, scoped, tag = 'input window, operand 3, single buffered']
    #allocation8 [shape = 'u8[2048]{0}', space=vmem, size = 0x800, scoped, tag = 'input window, operand 4, single buffered']
    #allocation9 [shape = 's32[1]{0}', space=sflag, size = 0x4, scoped, tag = 'scoped memory for tpu_custom_call.1']
    #allocation10 [shape = 'u8[1048576]{0}', space=vmem, size = 0x100000, scoped, tag = 'input window, operand 5, single buffered']
    #allocation11 [shape = 'u8[262144]{0}', space=vmem, size = 0x40000, scoped, tag = 'input window, operand 7, single buffered']
    #allocation12 [shape = 's32[1]{0}', space=sflag, size = 0x4, scoped, tag = 'scoped memory for tpu_custom_call.1']
    #allocation13 [shape = 'u8[4096]{0}', space=vmem, size = 0x1000, scoped, tag = 'output window, operand 0, single buffered']
    %14 = vsyncpa [#allocation3], 0
    %15 = vsyncpa [#allocation6], 0
    %16 = vsyncpa [#allocation9], 0
    %17 = vsyncpa [#allocation12], 0
    %18 = vsyncpa [#allocation4], 0
    // Predicated region
    $region2: #{tpu_custom_call.1} parent=1 // pred_check
      _
    $region3: #{tpu_custom_call.1} parent=1 // pred_check_branch
      %20 = sbr.rel (0) target = $region5
    $region4: #{tpu_custom_call.1} parent=1 // pred_region
      %s22 = ssub.s32 64, 64
      %23 = vsyncadd [#allocation3], %s22
      %s25 = sshll.u32 [#allocation2], 4
      %s26 = int_to_ptr.vmem [resolvable:$true] %s25
      %28 = dma.hbm_to_vmem [thread:$0]  %s0, 64, %s26, [#allocation3]
    $region5: #{tpu_custom_call.1} parent=1 // pred_fallthru
      _
    // Predicated region
    $region6: #{tpu_custom_call.1} parent=1 // pred_check
      _
    $region7: #{tpu_custom_call.1} parent=1 // pred_check_branch
      %30 = sbr.rel (0) target = $region9
    $region8: #{tpu_custom_call.1} parent=1 // pred_region
      %s32 = ssub.s32 2048, 2048
      %33 = vsyncadd [#allocation6], %s32
      %s34 = sshll.u32 [#allocation5], 4
      %s35 = int_to_ptr.vmem [resolvable:$true] %s34
      %40 = dma.hbm_to_vmem [thread:$0]  %s1, 2048, %s35, [#allocation6], 128, 128, 8
    $region9: #{tpu_custom_call.1} parent=1 // pred_fallthru
      _
    // Predicated region
    $region10: #{tpu_custom_call.1} parent=1 // pred_check
      _
    $region11: #{tpu_custom_call.1} parent=1 // pred_check_branch
      %42 = sbr.rel (0) target = $region13
    $region12: #{tpu_custom_call.1} parent=1 // pred_region
      _
    $region13: #{tpu_custom_call.1} parent=1 // pred_fallthru
      _
    // Predicated region
    $region14: #{tpu_custom_call.1} parent=1 // pred_check
      _
    $region15: #{tpu_custom_call.1} parent=1 // pred_check_branch
      %44 = sbr.rel (0) target = $region17
    $region16: #{tpu_custom_call.1} parent=1 // pred_region
      %s46 = ssub.s32 8192, 8192
      %47 = vsyncadd [#allocation6], %s46
      %s48 = sshll.u32 [#allocation7], 4
      %s49 = int_to_ptr.vmem [resolvable:$true] %s48
      %54 = dma.hbm_to_vmem [thread:$0]  %s3, 8192, %s49, [#allocation6], 256, 256, 16
    $region17: #{tpu_custom_call.1} parent=1 // pred_fallthru
      _
    // Predicated region
    $region18: #{tpu_custom_call.1} parent=1 // pred_check
      _
    $region19: #{tpu_custom_call.1} parent=1 // pred_check_branch
      %56 = sbr.rel (0) target = $region21
    $region20: #{tpu_custom_call.1} parent=1 // pred_region
      %s58 = ssub.s32 64, 64
      %59 = vsyncadd [#allocation9], %s58
      %s61 = sshll.u32 [#allocation8], 4
      %s62 = int_to_ptr.vmem [resolvable:$true] %s61
      %64 = dma.hbm_to_vmem [thread:$0]  %s4, 64, %s62, [#allocation9]
    $region21: #{tpu_custom_call.1} parent=1 // pred_fallthru
      _
    // Predicated region
    $region22: #{tpu_custom_call.1} parent=1 // pred_check
      _
    $region23: #{tpu_custom_call.1} parent=1 // pred_check_branch
      %66 = sbr.rel (0) target = $region25
    $region24: #{tpu_custom_call.1} parent=1 // pred_region
      %s68 = ssub.s32 32768, 32768
      %69 = vsyncadd [#allocation9], %s68
      %s70 = sshll.u32 [#allocation10], 4
      %s71 = int_to_ptr.vmem [resolvable:$true] %s70
      %76 = dma.hbm_to_vmem [thread:$0]  %s5, 32768, %s71, [#allocation9], 512, 512, 32
    $region25: #{tpu_custom_call.1} parent=1 // pred_fallthru
      _
    // Predicated region
    $region26: #{tpu_custom_call.1} parent=1 // pred_check
      _
    $region27: #{tpu_custom_call.1} parent=1 // pred_check_branch
      %78 = sbr.rel (0) target = $region29
    $region28: #{tpu_custom_call.1} parent=1 // pred_region
      _
    $region29: #{tpu_custom_call.1} parent=1 // pred_fallthru
      _
    // Predicated region
    $region30: #{tpu_custom_call.1} parent=1 // pred_check
      _
    $region31: #{tpu_custom_call.1} parent=1 // pred_check_branch
      %80 = sbr.rel (0) target = $region33
    $region32: #{tpu_custom_call.1} parent=1 // pred_region
      %s82 = ssub.s32 8192, 8192
      %83 = vsyncadd [#allocation12], %s82
      %s84 = sshll.u32 [#allocation11], 4
      %s85 = int_to_ptr.vmem [resolvable:$true] %s84
      %90 = dma.hbm_to_vmem [thread:$0]  %s7, 8192, %s85, [#allocation12], 64, 64, 4
    $region33: #{tpu_custom_call.1} parent=1 // pred_fallthru
      _
    // Predicated region
    $region34: #{tpu_custom_call.1} parent=1 // pred_check
      _
    $region35: #{tpu_custom_call.1} parent=1 // pred_check_branch
      %92 = sbr.rel (0) target = $region37
    $region36: #{tpu_custom_call.1} parent=1 // pred_region
      _
    $region37: #{tpu_custom_call.1} parent=1 // pred_fallthru
      _
    // Predicated region
    $region38: #{tpu_custom_call.1} parent=1 // pred_check
      _
    $region39: #{tpu_custom_call.1} parent=1 // pred_check_branch
      %94 = sbr.rel (0) target = $region41
    $region40: #{tpu_custom_call.1} parent=1 // pred_region
      %95 = dma.done [#allocation3], 64
    $region41: #{tpu_custom_call.1} parent=1 // pred_fallthru
      _
    // Predicated region
    $region42: #{tpu_custom_call.1} parent=1 // pred_check
      _
    $region43: #{tpu_custom_call.1} parent=1 // pred_check_branch
      %97 = sbr.rel (0) target = $region45
    $region44: #{tpu_custom_call.1} parent=1 // pred_region
      %98 = dma.done [#allocation6], 2048
    $region45: #{tpu_custom_call.1} parent=1 // pred_fallthru
      _
    // Predicated region
    $region46: #{tpu_custom_call.1} parent=1 // pred_check
      _
    $region47: #{tpu_custom_call.1} parent=1 // pred_check_branch
      %100 = sbr.rel (0) target = $region49
    $region48: #{tpu_custom_call.1} parent=1 // pred_region
      %101 = dma.done [#allocation6], 8192
    $region49: #{tpu_custom_call.1} parent=1 // pred_fallthru
      _
    // Predicated region
    $region50: #{tpu_custom_call.1} parent=1 // pred_check
      _
    $region51: #{tpu_custom_call.1} parent=1 // pred_check_branch
      %103 = sbr.rel (0) target = $region53
    $region52: #{tpu_custom_call.1} parent=1 // pred_region
      %104 = dma.done [#allocation9], 64
    $region53: #{tpu_custom_call.1} parent=1 // pred_fallthru
      _
    // Predicated region
    $region54: #{tpu_custom_call.1} parent=1 // pred_check
      _
    $region55: #{tpu_custom_call.1} parent=1 // pred_check_branch
      %106 = sbr.rel (0) target = $region57
    $region56: #{tpu_custom_call.1} parent=1 // pred_region
      %107 = dma.done [#allocation9], 32768
    $region57: #{tpu_custom_call.1} parent=1 // pred_fallthru
      _
    // Predicated region
    $region58: #{tpu_custom_call.1} parent=1 // pred_check
      _
    $region59: #{tpu_custom_call.1} parent=1 // pred_check_branch
      %109 = sbr.rel (0) target = $region61
    $region60: #{tpu_custom_call.1} parent=1 // pred_region
      %110 = dma.done [#allocation12], 8192
    $region61: #{tpu_custom_call.1} parent=1 // pred_fallthru
      _
    %v113 = vld [vmem:[#allocation2] sm:$0xf]
    %v114 = vld [vmem:[#allocation5] sm:$0xff]
    %v115 = vld [vmem:[#allocation5 + $0x8] sm:$0xff]
    %v116 = vld [vmem:[#allocation5 + $0x10] sm:$0xff]
    %v117 = vld [vmem:[#allocation5 + $0x18] sm:$0xff]
    %v118 = vld [vmem:[#allocation5 + $0x20] sm:$0xff]
    %v119 = vld [vmem:[#allocation5 + $0x28] sm:$0xff]
    %v120 = vld [vmem:[#allocation5 + $0x30] sm:$0xff]
    %v121 = vld [vmem:[#allocation5 + $0x38] sm:$0xff]
    %v122 = vld [vmem:[#allocation5 + $0x40] sm:$0xff]
    %v123 = vld [vmem:[#allocation5 + $0x48] sm:$0xff]
    %v124 = vld [vmem:[#allocation5 + $0x50] sm:$0xff]
    %v125 = vld [vmem:[#allocation5 + $0x58] sm:$0xff]
    %v126 = vld [vmem:[#allocation5 + $0x60] sm:$0xff]
    %v127 = vld [vmem:[#allocation5 + $0x68] sm:$0xff]
    %v128 = vld [vmem:[#allocation5 + $0x70] sm:$0xff]
    %v129 = vld [vmem:[#allocation5 + $0x78] sm:$0xff]
    %v130 = vld [vmem:[%s2] sm:$0x3]
    %v132 = vlaneseq
    %v133 = vshrl.u32 %v132, 7
    %v134 = vsub.s32 0, %v133
    %v135 = vrot.slane %v130, %v134
    %v136 = vlaneseq
    %v137 = vshrl.u32 %v136, 7
    %v138 = vsub.s32 1, %v137
    %v139 = vrot.slane %v130, %v138
    %v158 = vunpack.c.l.b16 %v114
    %v159 = vunpack.c.h.b16 %v114
    %v160 = vunpack.c.l.b16 %v115
    %v161 = vunpack.c.h.b16 %v115
    %v162 = vunpack.c.l.b16 %v116
    %v163 = vunpack.c.h.b16 %v116
    %v164 = vunpack.c.l.b16 %v117
    %v165 = vunpack.c.h.b16 %v117
    %v166 = vunpack.c.l.b16 %v118
    %v167 = vunpack.c.h.b16 %v118
    %v168 = vunpack.c.l.b16 %v119
    %v169 = vunpack.c.h.b16 %v119
    %v170 = vunpack.c.l.b16 %v120
    %v171 = vunpack.c.h.b16 %v120
    %v172 = vunpack.c.l.b16 %v121
    %v173 = vunpack.c.h.b16 %v121
    %v174 = vunpack.c.l.b16 %v122
    %v175 = vunpack.c.h.b16 %v122
    %v176 = vunpack.c.l.b16 %v123
    %v177 = vunpack.c.h.b16 %v123
    %v178 = vunpack.c.l.b16 %v124
    %v179 = vunpack.c.h.b16 %v124
    %v180 = vunpack.c.l.b16 %v125
    %v181 = vunpack.c.h.b16 %v125
    %v182 = vunpack.c.l.b16 %v126
    %v183 = vunpack.c.h.b16 %v126
    %v184 = vunpack.c.l.b16 %v127
    %v185 = vunpack.c.h.b16 %v127
    %v186 = vunpack.c.l.b16 %v128
    %v187 = vunpack.c.h.b16 %v128
    %v188 = vunpack.c.l.b16 %v129
    %v189 = vunpack.c.h.b16 %v129
    %v190 = vpack.c.b16 %v160, %v158
    %v191 = vpack.c.b16 %v161, %v159
    %v192 = vpack.c.b16 %v164, %v162
    %v193 = vpack.c.b16 %v165, %v163
    %v194 = vpack.c.b16 %v168, %v166
    %v195 = vpack.c.b16 %v169, %v167
    %v196 = vpack.c.b16 %v172, %v170
    %v197 = vpack.c.b16 %v173, %v171
    %v198 = vpack.c.b16 %v176, %v174
    %v199 = vpack.c.b16 %v177, %v175
    %v200 = vpack.c.b16 %v180, %v178
    %v201 = vpack.c.b16 %v181, %v179
    %v202 = vpack.c.b16 %v184, %v182
    %v203 = vpack.c.b16 %v185, %v183
    %v204 = vpack.c.b16 %v188, %v186
    %v205 = vpack.c.b16 %v189, %v187
    %222 = vmatprep.subr.bf16.mxu0 %v205
    %223 = vmatpush1.bf16.msra.mxu0 %v204
    %224 = vmatprep.subr.bf16.mxu0 %v203
    %225 = vmatpush1.bf16.msra.mxu0 %v202
    %226 = vmatprep.subr.bf16.mxu0 %v201
    %227 = vmatpush1.bf16.msra.mxu0 %v200
    %228 = vmatprep.subr.bf16.mxu0 %v199
    %229 = vmatpush1.bf16.msra.mxu0 %v198
    %230 = vmatprep.subr.bf16.mxu0 %v197
    %231 = vmatpush1.bf16.msra.mxu0 %v196
    %232 = vmatprep.subr.bf16.mxu0 %v195
    %233 = vmatpush1.bf16.msra.mxu0 %v194
    %234 = vmatprep.subr.bf16.mxu0 %v193
    %235 = vmatpush1.bf16.msra.mxu0 %v192
    %236 = vmatprep.subr.bf16.mxu0 %v191
    %237 = vmatpush1.bf16.msra.mxu0 %v190
    %238 = vmatprep.subr.bf16.mxu0 0
    %239 = vmatpush2.bf16.msra.mxu0 0
    %240 = vmatprep.subr.bf16.mxu0 0
    %241 = vmatpush2.bf16.msra.mxu0 0
    %242 = vmatprep.subr.bf16.mxu0 0
    %243 = vmatpush2.bf16.msra.mxu0 0
    %244 = vmatprep.subr.bf16.mxu0 0
    %245 = vmatpush2.bf16.msra.mxu0 0
    %246 = vmatprep.subr.bf16.mxu0 0
    %247 = vmatpush2.bf16.msra.mxu0 0
    %248 = vmatprep.subr.bf16.mxu0 0
    %249 = vmatpush2.bf16.msra.mxu0 0
    %250 = vmatprep.subr.bf16.mxu0 0
    %251 = vmatpush2.bf16.msra.mxu0 0
    %252 = vmatprep.subr.bf16.mxu0 0
    %253 = vmatpush2.bf16.msra.mxu0 0
    %254 = vmatprep.mubr.bf16.mxu0 0
    %255 = vmatmul.mubr.bf16.gmra.mxu0 %v113
    %v256 = vpop.f32.mrf.mxu0
    %v257 = vadd.f32 %v135, %v256
    %v258 = vpop.f32.mrf.mxu0
    %v259 = vadd.f32 %v139, %v258
    %v260 = vpop.f32.mrf.mxu0
    %v261 = vpop.f32.mrf.mxu0
    %262 = vdwg.mxu0
    %v263 = vpack.c.bf16 %v257, %v257
    %v264 = vpack.c.bf16 %v259, %v259
    %v265 = vmul.bf16 %v263, 1045249613
    %v266 = vmul.bf16 %v264, 1045249613
    %v267 = vmax.bf16 %v263, %v265
    %v268 = vmax.bf16 %v264, %v266
    %v269 = vld [vmem:[#allocation7] sm:$0xff]
    %v270 = vld [vmem:[#allocation7 + $0x8] sm:$0xff]
    %v271 = vld [vmem:[#allocation7 + $0x10] sm:$0xff]
    %v272 = vld [vmem:[#allocation7 + $0x18] sm:$0xff]
    %v273 = vld [vmem:[#allocation7 + $0x20] sm:$0xff]
    %v274 = vld [vmem:[#allocation7 + $0x28] sm:$0xff]
    %v275 = vld [vmem:[#allocation7 + $0x30] sm:$0xff]
    %v276 = vld [vmem:[#allocation7 + $0x38] sm:$0xff]
    %v277 = vld [vmem:[#allocation7 + $0x40] sm:$0xff]
    %v278 = vld [vmem:[#allocation7 + $0x48] sm:$0xff]
    %v279 = vld [vmem:[#allocation7 + $0x50] sm:$0xff]
    %v280 = vld [vmem:[#allocation7 + $0x58] sm:$0xff]
    %v281 = vld [vmem:[#allocation7 + $0x60] sm:$0xff]
    %v282 = vld [vmem:[#allocation7 + $0x68] sm:$0xff]
    %v283 = vld [vmem:[#allocation7 + $0x70] sm:$0xff]
    %v284 = vld [vmem:[#allocation7 + $0x78] sm:$0xff]
    %v285 = vld [vmem:[#allocation7 + $0x80] sm:$0xff]
    %v286 = vld [vmem:[#allocation7 + $0x88] sm:$0xff]
    %v287 = vld [vmem:[#allocation7 + $0x90] sm:$0xff]
    %v288 = vld [vmem:[#allocation7 + $0x98] sm:$0xff]
    %v289 = vld [vmem:[#allocation7 + $0xa0] sm:$0xff]
    %v290 = vld [vmem:[#allocation7 + $0xa8] sm:$0xff]
    %v291 = vld [vmem:[#allocation7 + $0xb0] sm:$0xff]
    %v292 = vld [vmem:[#allocation7 + $0xb8] sm:$0xff]
    %v293 = vld [vmem:[#allocation7 + $0xc0] sm:$0xff]
    %v294 = vld [vmem:[#allocation7 + $0xc8] sm:$0xff]
    %v295 = vld [vmem:[#allocation7 + $0xd0] sm:$0xff]
    %v296 = vld [vmem:[#allocation7 + $0xd8] sm:$0xff]
    %v297 = vld [vmem:[#allocation7 + $0xe0] sm:$0xff]
    %v298 = vld [vmem:[#allocation7 + $0xe8] sm:$0xff]
    %v299 = vld [vmem:[#allocation7 + $0xf0] sm:$0xff]
    %v300 = vld [vmem:[#allocation7 + $0xf8] sm:$0xff]
    %v301 = vld [vmem:[#allocation7 + $0x100] sm:$0xff]
    %v302 = vld [vmem:[#allocation7 + $0x108] sm:$0xff]
    %v303 = vld [vmem:[#allocation7 + $0x110] sm:$0xff]
    %v304 = vld [vmem:[#allocation7 + $0x118] sm:$0xff]
    %v305 = vld [vmem:[#allocation7 + $0x120] sm:$0xff]
    %v306 = vld [vmem:[#allocation7 + $0x128] sm:$0xff]
    %v307 = vld [vmem:[#allocation7 + $0x130] sm:$0xff]
    %v308 = vld [vmem:[#allocation7 + $0x138] sm:$0xff]
    %v309 = vld [vmem:[#allocation7 + $0x140] sm:$0xff]
    %v310 = vld [vmem:[#allocation7 + $0x148] sm:$0xff]
    %v311 = vld [vmem:[#allocation7 + $0x150] sm:$0xff]
    %v312 = vld [vmem:[#allocation7 + $0x158] sm:$0xff]
    %v313 = vld [vmem:[#allocation7 + $0x160] sm:$0xff]
    %v314 = vld [vmem:[#allocation7 + $0x168] sm:$0xff]
    %v315 = vld [vmem:[#allocation7 + $0x170] sm:$0xff]
    %v316 = vld [vmem:[#allocation7 + $0x178] sm:$0xff]
    %v317 = vld [vmem:[#allocation7 + $0x180] sm:$0xff]
    %v318 = vld [vmem:[#allocation7 + $0x188] sm:$0xff]
    %v319 = vld [vmem:[#allocation7 + $0x190] sm:$0xff]
    %v320 = vld [vmem:[#allocation7 + $0x198] sm:$0xff]
    %v321 = vld [vmem:[#allocation7 + $0x1a0] sm:$0xff]
    %v322 = vld [vmem:[#allocation7 + $0x1a8] sm:$0xff]
    %v323 = vld [vmem:[#allocation7 + $0x1b0] sm:$0xff]
    %v324 = vld [vmem:[#allocation7 + $0x1b8] sm:$0xff]
    %v325 = vld [vmem:[#allocation7 + $0x1c0] sm:$0xff]
    %v326 = vld [vmem:[#allocation7 + $0x1c8] sm:$0xff]
    %v327 = vld [vmem:[#allocation7 + $0x1d0] sm:$0xff]
    %v328 = vld [vmem:[#allocation7 + $0x1d8] sm:$0xff]
    %v329 = vld [vmem:[#allocation7 + $0x1e0] sm:$0xff]
    %v330 = vld [vmem:[#allocation7 + $0x1e8] sm:$0xff]
    %v331 = vld [vmem:[#allocation7 + $0x1f0] sm:$0xff]
    %v332 = vld [vmem:[#allocation7 + $0x1f8] sm:$0xff]
    %v333 = vld [vmem:[#allocation8] sm:$0xf]
    %v335 = vlaneseq
    %v336 = vshrl.u32 %v335, 7
    %v337 = vsub.s32 0, %v336
    %v338 = vrot.slane %v333, %v337
    %v339 = vlaneseq
    %v340 = vshrl.u32 %v339, 7
    %v341 = vsub.s32 1, %v340
    %v342 = vrot.slane %v333, %v341
    %v343 = vlaneseq
    %v344 = vshrl.u32 %v343, 7
    %v345 = vsub.s32 2, %v344
    %v346 = vrot.slane %v333, %v345
    %v347 = vlaneseq
    %v348 = vshrl.u32 %v347, 7
    %v349 = vsub.s32 3, %v348
    %v350 = vrot.slane %v333, %v349
    %v419 = vunpack.c.l.b16 %v269
    %v420 = vunpack.c.h.b16 %v269
    %v421 = vunpack.c.l.b16 %v270
    %v422 = vunpack.c.h.b16 %v270
    %v423 = vunpack.c.l.b16 %v271
    %v424 = vunpack.c.h.b16 %v271
    %v425 = vunpack.c.l.b16 %v272
    %v426 = vunpack.c.h.b16 %v272
    %v427 = vunpack.c.l.b16 %v273
    %v428 = vunpack.c.h.b16 %v273
    %v429 = vunpack.c.l.b16 %v274
    %v430 = vunpack.c.h.b16 %v274
    %v431 = vunpack.c.l.b16 %v275
    %v432 = vunpack.c.h.b16 %v275
    %v433 = vunpack.c.l.b16 %v276
    %v434 = vunpack.c.h.b16 %v276
    %v435 = vunpack.c.l.b16 %v277
    %v436 = vunpack.c.h.b16 %v277
    %v437 = vunpack.c.l.b16 %v278
    %v438 = vunpack.c.h.b16 %v278
    %v439 = vunpack.c.l.b16 %v279
    %v440 = vunpack.c.h.b16 %v279
    %v441 = vunpack.c.l.b16 %v280
    %v442 = vunpack.c.h.b16 %v280
    %v443 = vunpack.c.l.b16 %v281
    %v444 = vunpack.c.h.b16 %v281
    %v445 = vunpack.c.l.b16 %v282
    %v446 = vunpack.c.h.b16 %v282
    %v447 = vunpack.c.l.b16 %v283
    %v448 = vunpack.c.h.b16 %v283
    %v449 = vunpack.c.l.b16 %v284
    %v450 = vunpack.c.h.b16 %v284
    %v451 = vunpack.c.l.b16 %v285
    %v452 = vunpack.c.h.b16 %v285
    %v453 = vunpack.c.l.b16 %v286
    %v454 = vunpack.c.h.b16 %v286
    %v455 = vunpack.c.l.b16 %v287
    %v456 = vunpack.c.h.b16 %v287
    %v457 = vunpack.c.l.b16 %v288
    %v458 = vunpack.c.h.b16 %v288
    %v459 = vunpack.c.l.b16 %v289
    %v460 = vunpack.c.h.b16 %v289
    %v461 = vunpack.c.l.b16 %v290
    %v462 = vunpack.c.h.b16 %v290
    %v463 = vunpack.c.l.b16 %v291
    %v464 = vunpack.c.h.b16 %v291
    %v465 = vunpack.c.l.b16 %v292
    %v466 = vunpack.c.h.b16 %v292
    %v467 = vunpack.c.l.b16 %v293
    %v468 = vunpack.c.h.b16 %v293
    %v469 = vunpack.c.l.b16 %v294
    %v470 = vunpack.c.h.b16 %v294
    %v471 = vunpack.c.l.b16 %v295
    %v472 = vunpack.c.h.b16 %v295
    %v473 = vunpack.c.l.b16 %v296
    %v474 = vunpack.c.h.b16 %v296
    %v475 = vunpack.c.l.b16 %v297
    %v476 = vunpack.c.h.b16 %v297
    %v477 = vunpack.c.l.b16 %v298
    %v478 = vunpack.c.h.b16 %v298
    %v479 = vunpack.c.l.b16 %v299
    %v480 = vunpack.c.h.b16 %v299
    %v481 = vunpack.c.l.b16 %v300
    %v482 = vunpack.c.h.b16 %v300
    %v483 = vunpack.c.l.b16 %v301
    %v484 = vunpack.c.h.b16 %v301
    %v485 = vunpack.c.l.b16 %v302
    %v486 = vunpack.c.h.b16 %v302
    %v487 = vunpack.c.l.b16 %v303
    %v488 = vunpack.c.h.b16 %v303
    %v489 = vunpack.c.l.b16 %v304
    %v490 = vunpack.c.h.b16 %v304
    %v491 = vunpack.c.l.b16 %v305
    %v492 = vunpack.c.h.b16 %v305
    %v493 = vunpack.c.l.b16 %v306
    %v494 = vunpack.c.h.b16 %v306
    %v495 = vunpack.c.l.b16 %v307
    %v496 = vunpack.c.h.b16 %v307
    %v497 = vunpack.c.l.b16 %v308
    %v498 = vunpack.c.h.b16 %v308
    %v499 = vunpack.c.l.b16 %v309
    %v500 = vunpack.c.h.b16 %v309
    %v501 = vunpack.c.l.b16 %v310
    %v502 = vunpack.c.h.b16 %v310
    %v503 = vunpack.c.l.b16 %v311
    %v504 = vunpack.c.h.b16 %v311
    %v505 = vunpack.c.l.b16 %v312
    %v506 = vunpack.c.h.b16 %v312
    %v507 = vunpack.c.l.b16 %v313
    %v508 = vunpack.c.h.b16 %v313
    %v509 = vunpack.c.l.b16 %v314
    %v510 = vunpack.c.h.b16 %v314
    %v511 = vunpack.c.l.b16 %v315
    %v512 = vunpack.c.h.b16 %v315
    %v513 = vunpack.c.l.b16 %v316
    %v514 = vunpack.c.h.b16 %v316
    %v515 = vunpack.c.l.b16 %v317
    %v516 = vunpack.c.h.b16 %v317
    %v517 = vunpack.c.l.b16 %v318
    %v518 = vunpack.c.h.b16 %v318
    %v519 = vunpack.c.l.b16 %v319
    %v520 = vunpack.c.h.b16 %v319
    %v521 = vunpack.c.l.b16 %v320
    %v522 = vunpack.c.h.b16 %v320
    %v523 = vunpack.c.l.b16 %v321
    %v524 = vunpack.c.h.b16 %v321
    %v525 = vunpack.c.l.b16 %v322
    %v526 = vunpack.c.h.b16 %v322
    %v527 = vunpack.c.l.b16 %v323
    %v528 = vunpack.c.h.b16 %v323
    %v529 = vunpack.c.l.b16 %v324
    %v530 = vunpack.c.h.b16 %v324
    %v531 = vunpack.c.l.b16 %v325
    %v532 = vunpack.c.h.b16 %v325
    %v533 = vunpack.c.l.b16 %v326
    %v534 = vunpack.c.h.b16 %v326
    %v535 = vunpack.c.l.b16 %v327
    %v536 = vunpack.c.h.b16 %v327
    %v537 = vunpack.c.l.b16 %v328
    %v538 = vunpack.c.h.b16 %v328
    %v539 = vunpack.c.l.b16 %v329
    %v540 = vunpack.c.h.b16 %v329
    %v541 = vunpack.c.l.b16 %v330
    %v542 = vunpack.c.h.b16 %v330
    %v543 = vunpack.c.l.b16 %v331
    %v544 = vunpack.c.h.b16 %v331
    %v545 = vunpack.c.l.b16 %v332
    %v546 = vunpack.c.h.b16 %v332
    %v547 = vpack.c.b16 %v423, %v419
    %v548 = vpack.c.b16 %v424, %v420
    %v549 = vpack.c.b16 %v425, %v421
    %v550 = vpack.c.b16 %v426, %v422
    %v551 = vpack.c.b16 %v431, %v427
    %v552 = vpack.c.b16 %v432, %v428
    %v553 = vpack.c.b16 %v433, %v429
    %v554 = vpack.c.b16 %v434, %v430
    %v555 = vpack.c.b16 %v439, %v435
    %v556 = vpack.c.b16 %v440, %v436
    %v557 = vpack.c.b16 %v441, %v437
    %v558 = vpack.c.b16 %v442, %v438
    %v559 = vpack.c.b16 %v447, %v443
    %v560 = vpack.c.b16 %v448, %v444
    %v561 = vpack.c.b16 %v449, %v445
    %v562 = vpack.c.b16 %v450, %v446
    %v563 = vpack.c.b16 %v455, %v451
    %v564 = vpack.c.b16 %v456, %v452
    %v565 = vpack.c.b16 %v457, %v453
    %v566 = vpack.c.b16 %v458, %v454
    %v567 = vpack.c.b16 %v463, %v459
    %v568 = vpack.c.b16 %v464, %v460
    %v569 = vpack.c.b16 %v465, %v461
    %v570 = vpack.c.b16 %v466, %v462
    %v571 = vpack.c.b16 %v471, %v467
    %v572 = vpack.c.b16 %v472, %v468
    %v573 = vpack.c.b16 %v473, %v469
    %v574 = vpack.c.b16 %v474, %v470
    %v575 = vpack.c.b16 %v479, %v475
    %v576 = vpack.c.b16 %v480, %v476
    %v577 = vpack.c.b16 %v481, %v477
    %v578 = vpack.c.b16 %v482, %v478
    %v579 = vpack.c.b16 %v487, %v483
    %v580 = vpack.c.b16 %v488, %v484
    %v581 = vpack.c.b16 %v489, %v485
    %v582 = vpack.c.b16 %v490, %v486
    %v583 = vpack.c.b16 %v495, %v491
    %v584 = vpack.c.b16 %v496, %v492
    %v585 = vpack.c.b16 %v497, %v493
    %v586 = vpack.c.b16 %v498, %v494
    %v587 = vpack.c.b16 %v503, %v499
    %v588 = vpack.c.b16 %v504, %v500
    %v589 = vpack.c.b16 %v505, %v501
    %v590 = vpack.c.b16 %v506, %v502
    %v591 = vpack.c.b16 %v511, %v507
    %v592 = vpack.c.b16 %v512, %v508
    %v593 = vpack.c.b16 %v513, %v509
    %v594 = vpack.c.b16 %v514, %v510
    %v595 = vpack.c.b16 %v519, %v515
    %v596 = vpack.c.b16 %v520, %v516
    %v597 = vpack.c.b16 %v521, %v517
    %v598 = vpack.c.b16 %v522, %v518
    %v599 = vpack.c.b16 %v527, %v523
    %v600 = vpack.c.b16 %v528, %v524
    %v601 = vpack.c.b16 %v529, %v525
    %v602 = vpack.c.b16 %v530, %v526
    %v603 = vpack.c.b16 %v535, %v531
    %v604 = vpack.c.b16 %v536, %v532
    %v605 = vpack.c.b16 %v537, %v533
    %v606 = vpack.c.b16 %v538, %v534
    %v607 = vpack.c.b16 %v543, %v539
    %v608 = vpack.c.b16 %v544, %v540
    %v609 = vpack.c.b16 %v545, %v541
    %v610 = vpack.c.b16 %v546, %v542
    %675 = vmatprep.subr.bf16.mxu0 %v576
    %676 = vmatpush1.bf16.msra.mxu0 %v575
    %677 = vmatprep.subr.bf16.mxu0 %v572
    %678 = vmatpush1.bf16.msra.mxu0 %v571
    %679 = vmatprep.subr.bf16.mxu0 %v568
    %680 = vmatpush1.bf16.msra.mxu0 %v567
    %681 = vmatprep.subr.bf16.mxu0 %v564
    %682 = vmatpush1.bf16.msra.mxu0 %v563
    %683 = vmatprep.subr.bf16.mxu0 %v560
    %684 = vmatpush1.bf16.msra.mxu0 %v559
    %685 = vmatprep.subr.bf16.mxu0 %v556
    %686 = vmatpush1.bf16.msra.mxu0 %v555
    %687 = vmatprep.subr.bf16.mxu0 %v552
    %688 = vmatpush1.bf16.msra.mxu0 %v551
    %689 = vmatprep.subr.bf16.mxu0 %v548
    %690 = vmatpush1.bf16.msra.mxu0 %v547
    %691 = vmatprep.subr.bf16.mxu0 %v608
    %692 = vmatpush2.bf16.msra.mxu0 %v607
    %693 = vmatprep.subr.bf16.mxu0 %v604
    %694 = vmatpush2.bf16.msra.mxu0 %v603
    %695 = vmatprep.subr.bf16.mxu0 %v600
    %696 = vmatpush2.bf16.msra.mxu0 %v599
    %697 = vmatprep.subr.bf16.mxu0 %v596
    %698 = vmatpush2.bf16.msra.mxu0 %v595
    %699 = vmatprep.subr.bf16.mxu0 %v592
    %700 = vmatpush2.bf16.msra.mxu0 %v591
    %701 = vmatprep.subr.bf16.mxu0 %v588
    %702 = vmatpush2.bf16.msra.mxu0 %v587
    %703 = vmatprep.subr.bf16.mxu0 %v584
    %704 = vmatpush2.bf16.msra.mxu0 %v583
    %705 = vmatprep.subr.bf16.mxu0 %v580
    %706 = vmatpush2.bf16.msra.mxu0 %v579
    %707 = vmatprep.mubr.bf16.mxu0 %v268
    %708 = vmatmul.mubr.bf16.gmra.mxu0 %v267
    %v709 = vpop.f32.mrf.mxu0
    %v710 = vadd.f32 %v338, %v709
    %v711 = vpop.f32.mrf.mxu0
    %v712 = vadd.f32 %v342, %v711
    %v713 = vpop.f32.mrf.mxu0
    %v714 = vpop.f32.mrf.mxu0
    %715 = vdwg.mxu0
    %716 = vmatprep.subr.bf16.mxu0 %v578
    %717 = vmatpush1.bf16.msra.mxu0 %v577
    %718 = vmatprep.subr.bf16.mxu0 %v574
    %719 = vmatpush1.bf16.msra.mxu0 %v573
    %720 = vmatprep.subr.bf16.mxu0 %v570
    %721 = vmatpush1.bf16.msra.mxu0 %v569
    %722 = vmatprep.subr.bf16.mxu0 %v566
    %723 = vmatpush1.bf16.msra.mxu0 %v565
    %724 = vmatprep.subr.bf16.mxu0 %v562
    %725 = vmatpush1.bf16.msra.mxu0 %v561
    %726 = vmatprep.subr.bf16.mxu0 %v558
    %727 = vmatpush1.bf16.msra.mxu0 %v557
    %728 = vmatprep.subr.bf16.mxu0 %v554
    %729 = vmatpush1.bf16.msra.mxu0 %v553
    %730 = vmatprep.subr.bf16.mxu0 %v550
    %731 = vmatpush1.bf16.msra.mxu0 %v549
    %732 = vmatprep.subr.bf16.mxu0 %v610
    %733 = vmatpush2.bf16.msra.mxu0 %v609
    %734 = vmatprep.subr.bf16.mxu0 %v606
    %735 = vmatpush2.bf16.msra.mxu0 %v605
    %736 = vmatprep.subr.bf16.mxu0 %v602
    %737 = vmatpush2.bf16.msra.mxu0 %v601
    %738 = vmatprep.subr.bf16.mxu0 %v598
    %739 = vmatpush2.bf16.msra.mxu0 %v597
    %740 = vmatprep.subr.bf16.mxu0 %v594
    %741 = vmatpush2.bf16.msra.mxu0 %v593
    %742 = vmatprep.subr.bf16.mxu0 %v590
    %743 = vmatpush2.bf16.msra.mxu0 %v589
    %744 = vmatprep.subr.bf16.mxu0 %v586
    %745 = vmatpush2.bf16.msra.mxu0 %v585
    %746 = vmatprep.subr.bf16.mxu0 %v582
    %747 = vmatpush2.bf16.msra.mxu0 %v581
    %748 = vmatprep.mubr.bf16.mxu0 %v268
    %749 = vmatmul.mubr.bf16.gmra.mxu0 %v267
    %v750 = vpop.f32.mrf.mxu0
    %v751 = vadd.f32 %v346, %v750
    %v752 = vpop.f32.mrf.mxu0
    %v753 = vadd.f32 %v350, %v752
    %v754 = vpop.f32.mrf.mxu0
    %v755 = vpop.f32.mrf.mxu0
    %756 = vdwg.mxu0
    %v757 = vpack.c.bf16 %v710, %v710
    %v758 = vpack.c.bf16 %v712, %v712
    %v759 = vpack.c.bf16 %v751, %v751
    %v760 = vpack.c.bf16 %v753, %v753
    %v761 = vmul.bf16 %v757, 1045249613
    %v762 = vmul.bf16 %v758, 1045249613
    %v763 = vmul.bf16 %v759, 1045249613
    %v764 = vmul.bf16 %v760, 1045249613
    %v765 = vmax.bf16 %v757, %v761
    %v766 = vmax.bf16 %v758, %v762
    %v767 = vmax.bf16 %v759, %v763
    %v768 = vmax.bf16 %v760, %v764
    %v769 = vld [vmem:[#allocation10] sm:$0xff]
    %v770 = vld [vmem:[#allocation10 + $0x8] sm:$0xff]
    %v771 = vld [vmem:[#allocation10 + $0x10] sm:$0xff]
    %v772 = vld [vmem:[#allocation10 + $0x18] sm:$0xff]
    %v773 = vld [vmem:[#allocation10 + $0x20] sm:$0xff]
    %v774 = vld [vmem:[#allocation10 + $0x28] sm:$0xff]
    %v775 = vld [vmem:[#allocation10 + $0x30] sm:$0xff]
    %v776 = vld [vmem:[#allocation10 + $0x38] sm:$0xff]
    %v777 = vld [vmem:[#allocation10 + $0x40] sm:$0xff]
    %v778 = vld [vmem:[#allocation10 + $0x48] sm:$0xff]
    %v779 = vld [vmem:[#allocation10 + $0x50] sm:$0xff]
    %v780 = vld [vmem:[#allocation10 + $0x58] sm:$0xff]
    %v781 = vld [vmem:[#allocation10 + $0x60] sm:$0xff]
    %v782 = vld [vmem:[#allocation10 + $0x68] sm:$0xff]
    %v783 = vld [vmem:[#allocation10 + $0x70] sm:$0xff]
    %v784 = vld [vmem:[#allocation10 + $0x78] sm:$0xff]
    %v785 = vld [vmem:[#allocation10 + $0x80] sm:$0xff]
    %v786 = vld [vmem:[#allocation10 + $0x88] sm:$0xff]
    %v787 = vld [vmem:[#allocation10 + $0x90] sm:$0xff]
    %v788 = vld [vmem:[#allocation10 + $0x98] sm:$0xff]
    %v789 = vld [vmem:[#allocation10 + $0xa0] sm:$0xff]
    %v790 = vld [vmem:[#allocation10 + $0xa8] sm:$0xff]
    %v791 = vld [vmem:[#allocation10 + $0xb0] sm:$0xff]
    %v792 = vld [vmem:[#allocation10 + $0xb8] sm:$0xff]
    %v793 = vld [vmem:[#allocation10 + $0xc0] sm:$0xff]
    %v794 = vld [vmem:[#allocation10 + $0xc8] sm:$0xff]
    %v795 = vld [vmem:[#allocation10 + $0xd0] sm:$0xff]
    %v796 = vld [vmem:[#allocation10 + $0xd8] sm:$0xff]
    %v797 = vld [vmem:[#allocation10 + $0xe0] sm:$0xff]
    %v798 = vld [vmem:[#allocation10 + $0xe8] sm:$0xff]
    %v799 = vld [vmem:[#allocation10 + $0xf0] sm:$0xff]
    %v800 = vld [vmem:[#allocation10 + $0xf8] sm:$0xff]
    %v801 = vld [vmem:[#allocation10 + $0x100] sm:$0xff]
    %v802 = vld [vmem:[#allocation10 + $0x108] sm:$0xff]
    %v803 = vld [vmem:[#allocation10 + $0x110] sm:$0xff]
    %v804 = vld [vmem:[#allocation10 + $0x118] sm:$0xff]
    %v805 = vld [vmem:[#allocation10 + $0x120] sm:$0xff]
    %v806 = vld [vmem:[#allocation10 + $0x128] sm:$0xff]
    %v807 = vld [vmem:[#allocation10 + $0x130] sm:$0xff]
    %v808 = vld [vmem:[#allocation10 + $0x138] sm:$0xff]
    %v809 = vld [vmem:[#allocation10 + $0x140] sm:$0xff]
    %v810 = vld [vmem:[#allocation10 + $0x148] sm:$0xff]
    %v811 = vld [vmem:[#allocation10 + $0x150] sm:$0xff]
    %v812 = vld [vmem:[#allocation10 + $0x158] sm:$0xff]
    %v813 = vld [vmem:[#allocation10 + $0x160] sm:$0xff]
    %v814 = vld [vmem:[#allocation10 + $0x168] sm:$0xff]
    %v815 = vld [vmem:[#allocation10 + $0x170] sm:$0xff]
    %v816 = vld [vmem:[#allocation10 + $0x178] sm:$0xff]
    %v817 = vld [vmem:[#allocation10 + $0x180] sm:$0xff]
    %v818 = vld [vmem:[#allocation10 + $0x188] sm:$0xff]
    %v819 = vld [vmem:[#allocation10 + $0x190] sm:$0xff]
    %v820 = vld [vmem:[#allocation10 + $0x198] sm:$0xff]
    %v821 = vld [vmem:[#allocation10 + $0x1a0] sm:$0xff]
    %v822 = vld [vmem:[#allocation10 + $0x1a8] sm:$0xff]
    %v823 = vld [vmem:[#allocation10 + $0x1b0] sm:$0xff]
    %v824 = vld [vmem:[#allocation10 + $0x1b8] sm:$0xff]
    %v825 = vld [vmem:[#allocation10 + $0x1c0] sm:$0xff]
    %v826 = vld [vmem:[#allocation10 + $0x1c8] sm:$0xff]
    %v827 = vld [vmem:[#allocation10 + $0x1d0] sm:$0xff]
    %v828 = vld [vmem:[#allocation10 + $0x1d8] sm:$0xff]
    %v829 = vld [vmem:[#allocation10 + $0x1e0] sm:$0xff]
    %v830 = vld [vmem:[#allocation10 + $0x1e8] sm:$0xff]
    %v831 = vld [vmem:[#allocation10 + $0x1f0] sm:$0xff]
    %v832 = vld [vmem:[#allocation10 + $0x1f8] sm:$0xff]
    %v833 = vld [vmem:[#allocation10 + $0x200] sm:$0xff]
    %v834 = vld [vmem:[#allocation10 + $0x208] sm:$0xff]
    %v835 = vld [vmem:[#allocation10 + $0x210] sm:$0xff]
    %v836 = vld [vmem:[#allocation10 + $0x218] sm:$0xff]
    %v837 = vld [vmem:[#allocation10 + $0x220] sm:$0xff]
    %v838 = vld [vmem:[#allocation10 + $0x228] sm:$0xff]
    %v839 = vld [vmem:[#allocation10 + $0x230] sm:$0xff]
    %v840 = vld [vmem:[#allocation10 + $0x238] sm:$0xff]
    %v841 = vld [vmem:[#allocation10 + $0x240] sm:$0xff]
    %v842 = vld [vmem:[#allocation10 + $0x248] sm:$0xff]
    %v843 = vld [vmem:[#allocation10 + $0x250] sm:$0xff]
    %v844 = vld [vmem:[#allocation10 + $0x258] sm:$0xff]
    %v845 = vld [vmem:[#allocation10 + $0x260] sm:$0xff]
    %v846 = vld [vmem:[#allocation10 + $0x268] sm:$0xff]
    %v847 = vld [vmem:[#allocation10 + $0x270] sm:$0xff]
    %v848 = vld [vmem:[#allocation10 + $0x278] sm:$0xff]
    %v849 = vld [vmem:[#allocation10 + $0x280] sm:$0xff]
    %v850 = vld [vmem:[#allocation10 + $0x288] sm:$0xff]
    %v851 = vld [vmem:[#allocation10 + $0x290] sm:$0xff]
    %v852 = vld [vmem:[#allocation10 + $0x298] sm:$0xff]
    %v853 = vld [vmem:[#allocation10 + $0x2a0] sm:$0xff]
    %v854 = vld [vmem:[#allocation10 + $0x2a8] sm:$0xff]
    %v855 = vld [vmem:[#allocation10 + $0x2b0] sm:$0xff]
    %v856 = vld [vmem:[#allocation10 + $0x2b8] sm:$0xff]
    %v857 = vld [vmem:[#allocation10 + $0x2c0] sm:$0xff]
    %v858 = vld [vmem:[#allocation10 + $0x2c8] sm:$0xff]
    %v859 = vld [vmem:[#allocation10 + $0x2d0] sm:$0xff]
    %v860 = vld [vmem:[#allocation10 + $0x2d8] sm:$0xff]
    %v861 = vld [vmem:[#allocation10 + $0x2e0] sm:$0xff]
    %v862 = vld [vmem:[#allocation10 + $0x2e8] sm:$0xff]
    %v863 = vld [vmem:[#allocation10 + $0x2f0] sm:$0xff]
    %v864 = vld [vmem:[#allocation10 + $0x2f8] sm:$0xff]
    %v865 = vld [vmem:[#allocation10 + $0x300] sm:$0xff]
    %v866 = vld [vmem:[#allocation10 + $0x308] sm:$0xff]
    %v867 = vld [vmem:[#allocation10 + $0x310] sm:$0xff]
    %v868 = vld [vmem:[#allocation10 + $0x318] sm:$0xff]
    %v869 = vld [vmem:[#allocation10 + $0x320] sm:$0xff]
    %v870 = vld [vmem:[#allocation10 + $0x328] sm:$0xff]
    %v871 = vld [vmem:[#allocation10 + $0x330] sm:$0xff]
    %v872 = vld [vmem:[#allocation10 + $0x338] sm:$0xff]
    %v873 = vld [vmem:[#allocation10 + $0x340] sm:$0xff]
    %v874 = vld [vmem:[#allocation10 + $0x348] sm:$0xff]
    %v875 = vld [vmem:[#allocation10 + $0x350] sm:$0xff]
    %v876 = vld [vmem:[#allocation10 + $0x358] sm:$0xff]
    %v877 = vld [vmem:[#allocation10 + $0x360] sm:$0xff]
    %v878 = vld [vmem:[#allocation10 + $0x368] sm:$0xff]
    %v879 = vld [vmem:[#allocation10 + $0x370] sm:$0xff]
    %v880 = vld [vmem:[#allocation10 + $0x378] sm:$0xff]
    %v881 = vld [vmem:[#allocation10 + $0x380] sm:$0xff]
    %v882 = vld [vmem:[#allocation10 + $0x388] sm:$0xff]
    %v883 = vld [vmem:[#allocation10 + $0x390] sm:$0xff]
    %v884 = vld [vmem:[#allocation10 + $0x398] sm:$0xff]
    %v885 = vld [vmem:[#allocation10 + $0x3a0] sm:$0xff]
    %v886 = vld [vmem:[#allocation10 + $0x3a8] sm:$0xff]
    %v887 = vld [vmem:[#allocation10 + $0x3b0] sm:$0xff]
    %v888 = vld [vmem:[#allocation10 + $0x3b8] sm:$0xff]
    %v889 = vld [vmem:[#allocation10 + $0x3c0] sm:$0xff]
    %v890 = vld [vmem:[#allocation10 + $0x3c8] sm:$0xff]
    %v891 = vld [vmem:[#allocation10 + $0x3d0] sm:$0xff]
    %v892 = vld [vmem:[#allocation10 + $0x3d8] sm:$0xff]
    %v893 = vld [vmem:[#allocation10 + $0x3e0] sm:$0xff]
    %v894 = vld [vmem:[#allocation10 + $0x3e8] sm:$0xff]
    %v895 = vld [vmem:[#allocation10 + $0x3f0] sm:$0xff]
    %v896 = vld [vmem:[#allocation10 + $0x3f8] sm:$0xff]
    %v897 = vld [vmem:[#allocation10 + $0x400] sm:$0xff]
    %v898 = vld [vmem:[#allocation10 + $0x408] sm:$0xff]
    %v899 = vld [vmem:[#allocation10 + $0x410] sm:$0xff]
    %v900 = vld [vmem:[#allocation10 + $0x418] sm:$0xff]
    %v901 = vld [vmem:[#allocation10 + $0x420] sm:$0xff]
    %v902 = vld [vmem:[#allocation10 + $0x428] sm:$0xff]
    %v903 = vld [vmem:[#allocation10 + $0x430] sm:$0xff]
    %v904 = vld [vmem:[#allocation10 + $0x438] sm:$0xff]
    %v905 = vld [vmem:[#allocation10 + $0x440] sm:$0xff]
    %v906 = vld [vmem:[#allocation10 + $0x448] sm:$0xff]
    %v907 = vld [vmem:[#allocation10 + $0x450] sm:$0xff]
    %v908 = vld [vmem:[#allocation10 + $0x458] sm:$0xff]
    %v909 = vld [vmem:[#allocation10 + $0x460] sm:$0xff]
    %v910 = vld [vmem:[#allocation10 + $0x468] sm:$0xff]
    %v911 = vld [vmem:[#allocation10 + $0x470] sm:$0xff]
    %v912 = vld [vmem:[#allocation10 + $0x478] sm:$0xff]
    %v913 = vld [vmem:[#allocation10 + $0x480] sm:$0xff]
    %v914 = vld [vmem:[#allocation10 + $0x488] sm:$0xff]
    %v915 = vld [vmem:[#allocation10 + $0x490] sm:$0xff]
    %v916 = vld [vmem:[#allocation10 + $0x498] sm:$0xff]
    %v917 = vld [vmem:[#allocation10 + $0x4a0] sm:$0xff]
    %v918 = vld [vmem:[#allocation10 + $0x4a8] sm:$0xff]
    %v919 = vld [vmem:[#allocation10 + $0x4b0] sm:$0xff]
    %v920 = vld [vmem:[#allocation10 + $0x4b8] sm:$0xff]
    %v921 = vld [vmem:[#allocation10 + $0x4c0] sm:$0xff]
    %v922 = vld [vmem:[#allocation10 + $0x4c8] sm:$0xff]
    %v923 = vld [vmem:[#allocation10 + $0x4d0] sm:$0xff]
    %v924 = vld [vmem:[#allocation10 + $0x4d8] sm:$0xff]
    %v925 = vld [vmem:[#allocation10 + $0x4e0] sm:$0xff]
    %v926 = vld [vmem:[#allocation10 + $0x4e8] sm:$0xff]
    %v927 = vld [vmem:[#allocation10 + $0x4f0] sm:$0xff]
    %v928 = vld [vmem:[#allocation10 + $0x4f8] sm:$0xff]
    %v929 = vld [vmem:[#allocation10 + $0x500] sm:$0xff]
    %v930 = vld [vmem:[#allocation10 + $0x508] sm:$0xff]
    %v931 = vld [vmem:[#allocation10 + $0x510] sm:$0xff]
    %v932 = vld [vmem:[#allocation10 + $0x518] sm:$0xff]
    %v933 = vld [vmem:[#allocation10 + $0x520] sm:$0xff]
    %v934 = vld [vmem:[#allocation10 + $0x528] sm:$0xff]
    %v935 = vld [vmem:[#allocation10 + $0x530] sm:$0xff]
    %v936 = vld [vmem:[#allocation10 + $0x538] sm:$0xff]
    %v937 = vld [vmem:[#allocation10 + $0x540] sm:$0xff]
    %v938 = vld [vmem:[#allocation10 + $0x548] sm:$0xff]
    %v939 = vld [vmem:[#allocation10 + $0x550] sm:$0xff]
    %v940 = vld [vmem:[#allocation10 + $0x558] sm:$0xff]
    %v941 = vld [vmem:[#allocation10 + $0x560] sm:$0xff]
    %v942 = vld [vmem:[#allocation10 + $0x568] sm:$0xff]
    %v943 = vld [vmem:[#allocation10 + $0x570] sm:$0xff]
    %v944 = vld [vmem:[#allocation10 + $0x578] sm:$0xff]
    %v945 = vld [vmem:[#allocation10 + $0x580] sm:$0xff]
    %v946 = vld [vmem:[#allocation10 + $0x588] sm:$0xff]
    %v947 = vld [vmem:[#allocation10 + $0x590] sm:$0xff]
    %v948 = vld [vmem:[#allocation10 + $0x598] sm:$0xff]
    %v949 = vld [vmem:[#allocation10 + $0x5a0] sm:$0xff]
    %v950 = vld [vmem:[#allocation10 + $0x5a8] sm:$0xff]
    %v951 = vld [vmem:[#allocation10 + $0x5b0] sm:$0xff]
    %v952 = vld [vmem:[#allocation10 + $0x5b8] sm:$0xff]
    %v953 = vld [vmem:[#allocation10 + $0x5c0] sm:$0xff]
    %v954 = vld [vmem:[#allocation10 + $0x5c8] sm:$0xff]
    %v955 = vld [vmem:[#allocation10 + $0x5d0] sm:$0xff]
    %v956 = vld [vmem:[#allocation10 + $0x5d8] sm:$0xff]
    %v957 = vld [vmem:[#allocation10 + $0x5e0] sm:$0xff]
    %v958 = vld [vmem:[#allocation10 + $0x5e8] sm:$0xff]
    %v959 = vld [vmem:[#allocation10 + $0x5f0] sm:$0xff]
    %v960 = vld [vmem:[#allocation10 + $0x5f8] sm:$0xff]
    %v961 = vld [vmem:[#allocation10 + $0x600] sm:$0xff]
    %v962 = vld [vmem:[#allocation10 + $0x608] sm:$0xff]
    %v963 = vld [vmem:[#allocation10 + $0x610] sm:$0xff]
    %v964 = vld [vmem:[#allocation10 + $0x618] sm:$0xff]
    %v965 = vld [vmem:[#allocation10 + $0x620] sm:$0xff]
    %v966 = vld [vmem:[#allocation10 + $0x628] sm:$0xff]
    %v967 = vld [vmem:[#allocation10 + $0x630] sm:$0xff]
    %v968 = vld [vmem:[#allocation10 + $0x638] sm:$0xff]
    %v969 = vld [vmem:[#allocation10 + $0x640] sm:$0xff]
    %v970 = vld [vmem:[#allocation10 + $0x648] sm:$0xff]
    %v971 = vld [vmem:[#allocation10 + $0x650] sm:$0xff]
    %v972 = vld [vmem:[#allocation10 + $0x658] sm:$0xff]
    %v973 = vld [vmem:[#allocation10 + $0x660] sm:$0xff]
    %v974 = vld [vmem:[#allocation10 + $0x668] sm:$0xff]
    %v975 = vld [vmem:[#allocation10 + $0x670] sm:$0xff]
    %v976 = vld [vmem:[#allocation10 + $0x678] sm:$0xff]
    %v977 = vld [vmem:[#allocation10 + $0x680] sm:$0xff]
    %v978 = vld [vmem:[#allocation10 + $0x688] sm:$0xff]
    %v979 = vld [vmem:[#allocation10 + $0x690] sm:$0xff]
    %v980 = vld [vmem:[#allocation10 + $0x698] sm:$0xff]
    %v981 = vld [vmem:[#allocation10 + $0x6a0] sm:$0xff]
    %v982 = vld [vmem:[#allocation10 + $0x6a8] sm:$0xff]
    %v983 = vld [vmem:[#allocation10 + $0x6b0] sm:$0xff]
    %v984 = vld [vmem:[#allocation10 + $0x6b8] sm:$0xff]
    %v985 = vld [vmem:[#allocation10 + $0x6c0] sm:$0xff]
    %v986 = vld [vmem:[#allocation10 + $0x6c8] sm:$0xff]
    %v987 = vld [vmem:[#allocation10 + $0x6d0] sm:$0xff]
    %v988 = vld [vmem:[#allocation10 + $0x6d8] sm:$0xff]
    %v989 = vld [vmem:[#allocation10 + $0x6e0] sm:$0xff]
    %v990 = vld [vmem:[#allocation10 + $0x6e8] sm:$0xff]
    %v991 = vld [vmem:[#allocation10 + $0x6f0] sm:$0xff]
    %v992 = vld [vmem:[#allocation10 + $0x6f8] sm:$0xff]
    %v993 = vld [vmem:[#allocation10 + $0x700] sm:$0xff]
    %v994 = vld [vmem:[#allocation10 + $0x708] sm:$0xff]
    %v995 = vld [vmem:[#allocation10 + $0x710] sm:$0xff]
    %v996 = vld [vmem:[#allocation10 + $0x718] sm:$0xff]
    %v997 = vld [vmem:[#allocation10 + $0x720] sm:$0xff]
    %v998 = vld [vmem:[#allocation10 + $0x728] sm:$0xff]
    %v999 = vld [vmem:[#allocation10 + $0x730] sm:$0xff]
    %v1000 = vld [vmem:[#allocation10 + $0x738] sm:$0xff]
    %v1001 = vld [vmem:[#allocation10 + $0x740] sm:$0xff]
    %v1002 = vld [vmem:[#allocation10 + $0x748] sm:$0xff]
    %v1003 = vld [vmem:[#allocation10 + $0x750] sm:$0xff]
    %v1004 = vld [vmem:[#allocation10 + $0x758] sm:$0xff]
    %v1005 = vld [vmem:[#allocation10 + $0x760] sm:$0xff]
    %v1006 = vld [vmem:[#allocation10 + $0x768] sm:$0xff]
    %v1007 = vld [vmem:[#allocation10 + $0x770] sm:$0xff]
    %v1008 = vld [vmem:[#allocation10 + $0x778] sm:$0xff]
    %v1009 = vld [vmem:[#allocation10 + $0x780] sm:$0xff]
    %v1010 = vld [vmem:[#allocation10 + $0x788] sm:$0xff]
    %v1011 = vld [vmem:[#allocation10 + $0x790] sm:$0xff]
    %v1012 = vld [vmem:[#allocation10 + $0x798] sm:$0xff]
    %v1013 = vld [vmem:[#allocation10 + $0x7a0] sm:$0xff]
    %v1014 = vld [vmem:[#allocation10 + $0x7a8] sm:$0xff]
    %v1015 = vld [vmem:[#allocation10 + $0x7b0] sm:$0xff]
    %v1016 = vld [vmem:[#allocation10 + $0x7b8] sm:$0xff]
    %v1017 = vld [vmem:[#allocation10 + $0x7c0] sm:$0xff]
    %v1018 = vld [vmem:[#allocation10 + $0x7c8] sm:$0xff]
    %v1019 = vld [vmem:[#allocation10 + $0x7d0] sm:$0xff]
    %v1020 = vld [vmem:[#allocation10 + $0x7d8] sm:$0xff]
    %v1021 = vld [vmem:[#allocation10 + $0x7e0] sm:$0xff]
    %v1022 = vld [vmem:[#allocation10 + $0x7e8] sm:$0xff]
    %v1023 = vld [vmem:[#allocation10 + $0x7f0] sm:$0xff]
    %v1024 = vld [vmem:[#allocation10 + $0x7f8] sm:$0xff]
    %v1025 = vld [vmem:[%s6] sm:$0xff]
    %v1027 = vlaneseq
    %v1028 = vshrl.u32 %v1027, 7
    %v1029 = vsub.s32 0, %v1028
    %v1030 = vrot.slane %v1025, %v1029
    %v1031 = vlaneseq
    %v1032 = vshrl.u32 %v1031, 7
    %v1033 = vsub.s32 1, %v1032
    %v1034 = vrot.slane %v1025, %v1033
    %v1035 = vlaneseq
    %v1036 = vshrl.u32 %v1035, 7
    %v1037 = vsub.s32 2, %v1036
    %v1038 = vrot.slane %v1025, %v1037
    %v1039 = vlaneseq
    %v1040 = vshrl.u32 %v1039, 7
    %v1041 = vsub.s32 3, %v1040
    %v1042 = vrot.slane %v1025, %v1041
    %v1043 = vlaneseq
    %v1044 = vshrl.u32 %v1043, 7
    %v1045 = vsub.s32 4, %v1044
    %v1046 = vrot.slane %v1025, %v1045
    %v1047 = vlaneseq
    %v1048 = vshrl.u32 %v1047, 7
    %v1049 = vsub.s32 5, %v1048
    %v1050 = vrot.slane %v1025, %v1049
    %v1051 = vlaneseq
    %v1052 = vshrl.u32 %v1051, 7
    %v1053 = vsub.s32 6, %v1052
    %v1054 = vrot.slane %v1025, %v1053
    %v1055 = vlaneseq
    %v1056 = vshrl.u32 %v1055, 7
    %v1057 = vsub.s32 7, %v1056
    %v1058 = vrot.slane %v1025, %v1057
    %v1323 = vunpack.c.l.b16 %v769
    %v1324 = vunpack.c.h.b16 %v769
    %v1325 = vunpack.c.l.b16 %v770
    %v1326 = vunpack.c.h.b16 %v770
    %v1327 = vunpack.c.l.b16 %v771
    %v1328 = vunpack.c.h.b16 %v771
    %v1329 = vunpack.c.l.b16 %v772
    %v1330 = vunpack.c.h.b16 %v772
    %v1331 = vunpack.c.l.b16 %v773
    %v1332 = vunpack.c.h.b16 %v773
    %v1333 = vunpack.c.l.b16 %v774
    %v1334 = vunpack.c.h.b16 %v774
    %v1335 = vunpack.c.l.b16 %v775
    %v1336 = vunpack.c.h.b16 %v775
    %v1337 = vunpack.c.l.b16 %v776
    %v1338 = vunpack.c.h.b16 %v776
    %v1339 = vunpack.c.l.b16 %v777
    %v1340 = vunpack.c.h.b16 %v777
    %v1341 = vunpack.c.l.b16 %v778
    %v1342 = vunpack.c.h.b16 %v778
    %v1343 = vunpack.c.l.b16 %v779
    %v1344 = vunpack.c.h.b16 %v779
    %v1345 = vunpack.c.l.b16 %v780
    %v1346 = vunpack.c.h.b16 %v780
    %v1347 = vunpack.c.l.b16 %v781
    %v1348 = vunpack.c.h.b16 %v781
    %v1349 = vunpack.c.l.b16 %v782
    %v1350 = vunpack.c.h.b16 %v782
    %v1351 = vunpack.c.l.b16 %v783
    %v1352 = vunpack.c.h.b16 %v783
    %v1353 = vunpack.c.l.b16 %v784
    %v1354 = vunpack.c.h.b16 %v784
    %v1355 = vunpack.c.l.b16 %v785
    %v1356 = vunpack.c.h.b16 %v785
    %v1357 = vunpack.c.l.b16 %v786
    %v1358 = vunpack.c.h.b16 %v786
    %v1359 = vunpack.c.l.b16 %v787
    %v1360 = vunpack.c.h.b16 %v787
    %v1361 = vunpack.c.l.b16 %v788
    %v1362 = vunpack.c.h.b16 %v788
    %v1363 = vunpack.c.l.b16 %v789
    %v1364 = vunpack.c.h.b16 %v789
    %v1365 = vunpack.c.l.b16 %v790
    %v1366 = vunpack.c.h.b16 %v790
    %v1367 = vunpack.c.l.b16 %v791
    %v1368 = vunpack.c.h.b16 %v791
    %v1369 = vunpack.c.l.b16 %v792
    %v1370 = vunpack.c.h.b16 %v792
    %v1371 = vunpack.c.l.b16 %v793
    %v1372 = vunpack.c.h.b16 %v793
    %v1373 = vunpack.c.l.b16 %v794
    %v1374 = vunpack.c.h.b16 %v794
    %v1375 = vunpack.c.l.b16 %v795
    %v1376 = vunpack.c.h.b16 %v795
    %v1377 = vunpack.c.l.b16 %v796
    %v1378 = vunpack.c.h.b16 %v796
    %v1379 = vunpack.c.l.b16 %v797
    %v1380 = vunpack.c.h.b16 %v797
    %v1381 = vunpack.c.l.b16 %v798
    %v1382 = vunpack.c.h.b16 %v798
    %v1383 = vunpack.c.l.b16 %v799
    %v1384 = vunpack.c.h.b16 %v799
    %v1385 = vunpack.c.l.b16 %v800
    %v1386 = vunpack.c.h.b16 %v800
    %v1387 = vunpack.c.l.b16 %v801
    %v1388 = vunpack.c.h.b16 %v801
    %v1389 = vunpack.c.l.b16 %v802
    %v1390 = vunpack.c.h.b16 %v802
    %v1391 = vunpack.c.l.b16 %v803
    %v1392 = vunpack.c.h.b16 %v803
    %v1393 = vunpack.c.l.b16 %v804
    %v1394 = vunpack.c.h.b16 %v804
    %v1395 = vunpack.c.l.b16 %v805
    %v1396 = vunpack.c.h.b16 %v805
    %v1397 = vunpack.c.l.b16 %v806
    %v1398 = vunpack.c.h.b16 %v806
    %v1399 = vunpack.c.l.b16 %v807
    %v1400 = vunpack.c.h.b16 %v807
    %v1401 = vunpack.c.l.b16 %v808
    %v1402 = vunpack.c.h.b16 %v808
    %v1403 = vunpack.c.l.b16 %v809
    %v1404 = vunpack.c.h.b16 %v809
    %v1405 = vunpack.c.l.b16 %v810
    %v1406 = vunpack.c.h.b16 %v810
    %v1407 = vunpack.c.l.b16 %v811
    %v1408 = vunpack.c.h.b16 %v811
    %v1409 = vunpack.c.l.b16 %v812
    %v1410 = vunpack.c.h.b16 %v812
    %v1411 = vunpack.c.l.b16 %v813
    %v1412 = vunpack.c.h.b16 %v813
    %v1413 = vunpack.c.l.b16 %v814
    %v1414 = vunpack.c.h.b16 %v814
    %v1415 = vunpack.c.l.b16 %v815
    %v1416 = vunpack.c.h.b16 %v815
    %v1417 = vunpack.c.l.b16 %v816
    %v1418 = vunpack.c.h.b16 %v816
    %v1419 = vunpack.c.l.b16 %v817
    %v1420 = vunpack.c.h.b16 %v817
    %v1421 = vunpack.c.l.b16 %v818
    %v1422 = vunpack.c.h.b16 %v818
    %v1423 = vunpack.c.l.b16 %v819
    %v1424 = vunpack.c.h.b16 %v819
    %v1425 = vunpack.c.l.b16 %v820
    %v1426 = vunpack.c.h.b16 %v820
    %v1427 = vunpack.c.l.b16 %v821
    %v1428 = vunpack.c.h.b16 %v821
    %v1429 = vunpack.c.l.b16 %v822
    %v1430 = vunpack.c.h.b16 %v822
    %v1431 = vunpack.c.l.b16 %v823
    %v1432 = vunpack.c.h.b16 %v823
    %v1433 = vunpack.c.l.b16 %v824
    %v1434 = vunpack.c.h.b16 %v824
    %v1435 = vunpack.c.l.b16 %v825
    %v1436 = vunpack.c.h.b16 %v825
    %v1437 = vunpack.c.l.b16 %v826
    %v1438 = vunpack.c.h.b16 %v826
    %v1439 = vunpack.c.l.b16 %v827
    %v1440 = vunpack.c.h.b16 %v827
    %v1441 = vunpack.c.l.b16 %v828
    %v1442 = vunpack.c.h.b16 %v828
    %v1443 = vunpack.c.l.b16 %v829
    %v1444 = vunpack.c.h.b16 %v829
    %v1445 = vunpack.c.l.b16 %v830
    %v1446 = vunpack.c.h.b16 %v830
    %v1447 = vunpack.c.l.b16 %v831
    %v1448 = vunpack.c.h.b16 %v831
    %v1449 = vunpack.c.l.b16 %v832
    %v1450 = vunpack.c.h.b16 %v832
    %v1451 = vunpack.c.l.b16 %v833
    %v1452 = vunpack.c.h.b16 %v833
    %v1453 = vunpack.c.l.b16 %v834
    %v1454 = vunpack.c.h.b16 %v834
    %v1455 = vunpack.c.l.b16 %v835
    %v1456 = vunpack.c.h.b16 %v835
    %v1457 = vunpack.c.l.b16 %v836
    %v1458 = vunpack.c.h.b16 %v836
    %v1459 = vunpack.c.l.b16 %v837
    %v1460 = vunpack.c.h.b16 %v837
    %v1461 = vunpack.c.l.b16 %v838
    %v1462 = vunpack.c.h.b16 %v838
    %v1463 = vunpack.c.l.b16 %v839
    %v1464 = vunpack.c.h.b16 %v839
    %v1465 = vunpack.c.l.b16 %v840
    %v1466 = vunpack.c.h.b16 %v840
    %v1467 = vunpack.c.l.b16 %v841
    %v1468 = vunpack.c.h.b16 %v841
    %v1469 = vunpack.c.l.b16 %v842
    %v1470 = vunpack.c.h.b16 %v842
    %v1471 = vunpack.c.l.b16 %v843
    %v1472 = vunpack.c.h.b16 %v843
    %v1473 = vunpack.c.l.b16 %v844
    %v1474 = vunpack.c.h.b16 %v844
    %v1475 = vunpack.c.l.b16 %v845
    %v1476 = vunpack.c.h.b16 %v845
    %v1477 = vunpack.c.l.b16 %v846
    %v1478 = vunpack.c.h.b16 %v846
    %v1479 = vunpack.c.l.b16 %v847
    %v1480 = vunpack.c.h.b16 %v847
    %v1481 = vunpack.c.l.b16 %v848
    %v1482 = vunpack.c.h.b16 %v848
    %v1483 = vunpack.c.l.b16 %v849
    %v1484 = vunpack.c.h.b16 %v849
    %v1485 = vunpack.c.l.b16 %v850
    %v1486 = vunpack.c.h.b16 %v850
    %v1487 = vunpack.c.l.b16 %v851
    %v1488 = vunpack.c.h.b16 %v851
    %v1489 = vunpack.c.l.b16 %v852
    %v1490 = vunpack.c.h.b16 %v852
    %v1491 = vunpack.c.l.b16 %v853
    %v1492 = vunpack.c.h.b16 %v853
    %v1493 = vunpack.c.l.b16 %v854
    %v1494 = vunpack.c.h.b16 %v854
    %v1495 = vunpack.c.l.b16 %v855
    %v1496 = vunpack.c.h.b16 %v855
    %v1497 = vunpack.c.l.b16 %v856
    %v1498 = vunpack.c.h.b16 %v856
    %v1499 = vunpack.c.l.b16 %v857
    %v1500 = vunpack.c.h.b16 %v857
    %v1501 = vunpack.c.l.b16 %v858
    %v1502 = vunpack.c.h.b16 %v858
    %v1503 = vunpack.c.l.b16 %v859
    %v1504 = vunpack.c.h.b16 %v859
    %v1505 = vunpack.c.l.b16 %v860
    %v1506 = vunpack.c.h.b16 %v860
    %v1507 = vunpack.c.l.b16 %v861
    %v1508 = vunpack.c.h.b16 %v861
    %v1509 = vunpack.c.l.b16 %v862
    %v1510 = vunpack.c.h.b16 %v862
    %v1511 = vunpack.c.l.b16 %v863
    %v1512 = vunpack.c.h.b16 %v863
    %v1513 = vunpack.c.l.b16 %v864
    %v1514 = vunpack.c.h.b16 %v864
    %v1515 = vunpack.c.l.b16 %v865
    %v1516 = vunpack.c.h.b16 %v865
    %v1517 = vunpack.c.l.b16 %v866
    %v1518 = vunpack.c.h.b16 %v866
    %v1519 = vunpack.c.l.b16 %v867
    %v1520 = vunpack.c.h.b16 %v867
    %v1521 = vunpack.c.l.b16 %v868
    %v1522 = vunpack.c.h.b16 %v868
    %v1523 = vunpack.c.l.b16 %v869
    %v1524 = vunpack.c.h.b16 %v869
    %v1525 = vunpack.c.l.b16 %v870
    %v1526 = vunpack.c.h.b16 %v870
    %v1527 = vunpack.c.l.b16 %v871
    %v1528 = vunpack.c.h.b16 %v871
    %v1529 = vunpack.c.l.b16 %v872
    %v1530 = vunpack.c.h.b16 %v872
    %v1531 = vunpack.c.l.b16 %v873
    %v1532 = vunpack.c.h.b16 %v873
    %v1533 = vunpack.c.l.b16 %v874
    %v1534 = vunpack.c.h.b16 %v874
    %v1535 = vunpack.c.l.b16 %v875
    %v1536 = vunpack.c.h.b16 %v875
    %v1537 = vunpack.c.l.b16 %v876
    %v1538 = vunpack.c.h.b16 %v876
    %v1539 = vunpack.c.l.b16 %v877
    %v1540 = vunpack.c.h.b16 %v877
    %v1541 = vunpack.c.l.b16 %v878
    %v1542 = vunpack.c.h.b16 %v878
    %v1543 = vunpack.c.l.b16 %v879
    %v1544 = vunpack.c.h.b16 %v879
    %v1545 = vunpack.c.l.b16 %v880
    %v1546 = vunpack.c.h.b16 %v880
    %v1547 = vunpack.c.l.b16 %v881
    %v1548 = vunpack.c.h.b16 %v881
    %v1549 = vunpack.c.l.b16 %v882
    %v1550 = vunpack.c.h.b16 %v882
    %v1551 = vunpack.c.l.b16 %v883
    %v1552 = vunpack.c.h.b16 %v883
    %v1553 = vunpack.c.l.b16 %v884
    %v1554 = vunpack.c.h.b16 %v884
    %v1555 = vunpack.c.l.b16 %v885
    %v1556 = vunpack.c.h.b16 %v885
    %v1557 = vunpack.c.l.b16 %v886
    %v1558 = vunpack.c.h.b16 %v886
    %v1559 = vunpack.c.l.b16 %v887
    %v1560 = vunpack.c.h.b16 %v887
    %v1561 = vunpack.c.l.b16 %v888
    %v1562 = vunpack.c.h.b16 %v888
    %v1563 = vunpack.c.l.b16 %v889
    %v1564 = vunpack.c.h.b16 %v889
    %v1565 = vunpack.c.l.b16 %v890
    %v1566 = vunpack.c.h.b16 %v890
    %v1567 = vunpack.c.l.b16 %v891
    %v1568 = vunpack.c.h.b16 %v891
    %v1569 = vunpack.c.l.b16 %v892
    %v1570 = vunpack.c.h.b16 %v892
    %v1571 = vunpack.c.l.b16 %v893
    %v1572 = vunpack.c.h.b16 %v893
    %v1573 = vunpack.c.l.b16 %v894
    %v1574 = vunpack.c.h.b16 %v894
    %v1575 = vunpack.c.l.b16 %v895
    %v1576 = vunpack.c.h.b16 %v895
    %v1577 = vunpack.c.l.b16 %v896
    %v1578 = vunpack.c.h.b16 %v896
    %v1579 = vunpack.c.l.b16 %v897
    %v1580 = vunpack.c.h.b16 %v897
    %v1581 = vunpack.c.l.b16 %v898
    %v1582 = vunpack.c.h.b16 %v898
    %v1583 = vunpack.c.l.b16 %v899
    %v1584 = vunpack.c.h.b16 %v899
    %v1585 = vunpack.c.l.b16 %v900
    %v1586 = vunpack.c.h.b16 %v900
    %v1587 = vunpack.c.l.b16 %v901
    %v1588 = vunpack.c.h.b16 %v901
    %v1589 = vunpack.c.l.b16 %v902
    %v1590 = vunpack.c.h.b16 %v902
    %v1591 = vunpack.c.l.b16 %v903
    %v1592 = vunpack.c.h.b16 %v903
    %v1593 = vunpack.c.l.b16 %v904
    %v1594 = vunpack.c.h.b16 %v904
    %v1595 = vunpack.c.l.b16 %v905
    %v1596 = vunpack.c.h.b16 %v905
    %v1597 = vunpack.c.l.b16 %v906
    %v1598 = vunpack.c.h.b16 %v906
    %v1599 = vunpack.c.l.b16 %v907
    %v1600 = vunpack.c.h.b16 %v907
    %v1601 = vunpack.c.l.b16 %v908
    %v1602 = vunpack.c.h.b16 %v908
    %v1603 = vunpack.c.l.b16 %v909
    %v1604 = vunpack.c.h.b16 %v909
    %v1605 = vunpack.c.l.b16 %v910
    %v1606 = vunpack.c.h.b16 %v910
    %v1607 = vunpack.c.l.b16 %v911
    %v1608 = vunpack.c.h.b16 %v911
    %v1609 = vunpack.c.l.b16 %v912
    %v1610 = vunpack.c.h.b16 %v912
    %v1611 = vunpack.c.l.b16 %v913
    %v1612 = vunpack.c.h.b16 %v913
    %v1613 = vunpack.c.l.b16 %v914
    %v1614 = vunpack.c.h.b16 %v914
    %v1615 = vunpack.c.l.b16 %v915
    %v1616 = vunpack.c.h.b16 %v915
    %v1617 = vunpack.c.l.b16 %v916
    %v1618 = vunpack.c.h.b16 %v916
    %v1619 = vunpack.c.l.b16 %v917
    %v1620 = vunpack.c.h.b16 %v917
    %v1621 = vunpack.c.l.b16 %v918
    %v1622 = vunpack.c.h.b16 %v918
    %v1623 = vunpack.c.l.b16 %v919
    %v1624 = vunpack.c.h.b16 %v919
    %v1625 = vunpack.c.l.b16 %v920
    %v1626 = vunpack.c.h.b16 %v920
    %v1627 = vunpack.c.l.b16 %v921
    %v1628 = vunpack.c.h.b16 %v921
    %v1629 = vunpack.c.l.b16 %v922
    %v1630 = vunpack.c.h.b16 %v922
    %v1631 = vunpack.c.l.b16 %v923
    %v1632 = vunpack.c.h.b16 %v923
    %v1633 = vunpack.c.l.b16 %v924
    %v1634 = vunpack.c.h.b16 %v924
    %v1635 = vunpack.c.l.b16 %v925
    %v1636 = vunpack.c.h.b16 %v925
    %v1637 = vunpack.c.l.b16 %v926
    %v1638 = vunpack.c.h.b16 %v926
    %v1639 = vunpack.c.l.b16 %v927
    %v1640 = vunpack.c.h.b16 %v927
    %v1641 = vunpack.c.l.b16 %v928
    %v1642 = vunpack.c.h.b16 %v928
    %v1643 = vunpack.c.l.b16 %v929
    %v1644 = vunpack.c.h.b16 %v929
    %v1645 = vunpack.c.l.b16 %v930
    %v1646 = vunpack.c.h.b16 %v930
    %v1647 = vunpack.c.l.b16 %v931
    %v1648 = vunpack.c.h.b16 %v931
    %v1649 = vunpack.c.l.b16 %v932
    %v1650 = vunpack.c.h.b16 %v932
    %v1651 = vunpack.c.l.b16 %v933
    %v1652 = vunpack.c.h.b16 %v933
    %v1653 = vunpack.c.l.b16 %v934
    %v1654 = vunpack.c.h.b16 %v934
    %v1655 = vunpack.c.l.b16 %v935
    %v1656 = vunpack.c.h.b16 %v935
    %v1657 = vunpack.c.l.b16 %v936
    %v1658 = vunpack.c.h.b16 %v936
    %v1659 = vunpack.c.l.b16 %v937
    %v1660 = vunpack.c.h.b16 %v937
    %v1661 = vunpack.c.l.b16 %v938
    %v1662 = vunpack.c.h.b16 %v938
    %v1663 = vunpack.c.l.b16 %v939
    %v1664 = vunpack.c.h.b16 %v939
    %v1665 = vunpack.c.l.b16 %v940
    %v1666 = vunpack.c.h.b16 %v940
    %v1667 = vunpack.c.l.b16 %v941
    %v1668 = vunpack.c.h.b16 %v941
    %v1669 = vunpack.c.l.b16 %v942
    %v1670 = vunpack.c.h.b16 %v942
    %v1671 = vunpack.c.l.b16 %v943
    %v1672 = vunpack.c.h.b16 %v943
    %v1673 = vunpack.c.l.b16 %v944
    %v1674 = vunpack.c.h.b16 %v944
    %v1675 = vunpack.c.l.b16 %v945
    %v1676 = vunpack.c.h.b16 %v945
    %v1677 = vunpack.c.l.b16 %v946
    %v1678 = vunpack.c.h.b16 %v946
    %v1679 = vunpack.c.l.b16 %v947
    %v1680 = vunpack.c.h.b16 %v947
    %v1681 = vunpack.c.l.b16 %v948
    %v1682 = vunpack.c.h.b16 %v948
    %v1683 = vunpack.c.l.b16 %v949
    %v1684 = vunpack.c.h.b16 %v949
    %v1685 = vunpack.c.l.b16 %v950
    %v1686 = vunpack.c.h.b16 %v950
    %v1687 = vunpack.c.l.b16 %v951
    %v1688 = vunpack.c.h.b16 %v951
    %v1689 = vunpack.c.l.b16 %v952
    %v1690 = vunpack.c.h.b16 %v952
    %v1691 = vunpack.c.l.b16 %v953
    %v1692 = vunpack.c.h.b16 %v953
    %v1693 = vunpack.c.l.b16 %v954
    %v1694 = vunpack.c.h.b16 %v954
    %v1695 = vunpack.c.l.b16 %v955
    %v1696 = vunpack.c.h.b16 %v955
    %v1697 = vunpack.c.l.b16 %v956
    %v1698 = vunpack.c.h.b16 %v956
    %v1699 = vunpack.c.l.b16 %v957
    %v1700 = vunpack.c.h.b16 %v957
    %v1701 = vunpack.c.l.b16 %v958
    %v1702 = vunpack.c.h.b16 %v958
    %v1703 = vunpack.c.l.b16 %v959
    %v1704 = vunpack.c.h.b16 %v959
    %v1705 = vunpack.c.l.b16 %v960
    %v1706 = vunpack.c.h.b16 %v960
    %v1707 = vunpack.c.l.b16 %v961
    %v1708 = vunpack.c.h.b16 %v961
    %v1709 = vunpack.c.l.b16 %v962
    %v1710 = vunpack.c.h.b16 %v962
    %v1711 = vunpack.c.l.b16 %v963
    %v1712 = vunpack.c.h.b16 %v963
    %v1713 = vunpack.c.l.b16 %v964
    %v1714 = vunpack.c.h.b16 %v964
    %v1715 = vunpack.c.l.b16 %v965
    %v1716 = vunpack.c.h.b16 %v965
    %v1717 = vunpack.c.l.b16 %v966
    %v1718 = vunpack.c.h.b16 %v966
    %v1719 = vunpack.c.l.b16 %v967
    %v1720 = vunpack.c.h.b16 %v967
    %v1721 = vunpack.c.l.b16 %v968
    %v1722 = vunpack.c.h.b16 %v968
    %v1723 = vunpack.c.l.b16 %v969
    %v1724 = vunpack.c.h.b16 %v969
    %v1725 = vunpack.c.l.b16 %v970
    %v1726 = vunpack.c.h.b16 %v970
    %v1727 = vunpack.c.l.b16 %v971
    %v1728 = vunpack.c.h.b16 %v971
    %v1729 = vunpack.c.l.b16 %v972
    %v1730 = vunpack.c.h.b16 %v972
    %v1731 = vunpack.c.l.b16 %v973
    %v1732 = vunpack.c.h.b16 %v973
    %v1733 = vunpack.c.l.b16 %v974
    %v1734 = vunpack.c.h.b16 %v974
    %v1735 = vunpack.c.l.b16 %v975
    %v1736 = vunpack.c.h.b16 %v975
    %v1737 = vunpack.c.l.b16 %v976
    %v1738 = vunpack.c.h.b16 %v976
    %v1739 = vunpack.c.l.b16 %v977
    %v1740 = vunpack.c.h.b16 %v977
    %v1741 = vunpack.c.l.b16 %v978
    %v1742 = vunpack.c.h.b16 %v978
    %v1743 = vunpack.c.l.b16 %v979
    %v1744 = vunpack.c.h.b16 %v979
    %v1745 = vunpack.c.l.b16 %v980
    %v1746 = vunpack.c.h.b16 %v980
    %v1747 = vunpack.c.l.b16 %v981
    %v1748 = vunpack.c.h.b16 %v981
    %v1749 = vunpack.c.l.b16 %v982
    %v1750 = vunpack.c.h.b16 %v982
    %v1751 = vunpack.c.l.b16 %v983
    %v1752 = vunpack.c.h.b16 %v983
    %v1753 = vunpack.c.l.b16 %v984
    %v1754 = vunpack.c.h.b16 %v984
    %v1755 = vunpack.c.l.b16 %v985
    %v1756 = vunpack.c.h.b16 %v985
    %v1757 = vunpack.c.l.b16 %v986
    %v1758 = vunpack.c.h.b16 %v986
    %v1759 = vunpack.c.l.b16 %v987
    %v1760 = vunpack.c.h.b16 %v987
    %v1761 = vunpack.c.l.b16 %v988
    %v1762 = vunpack.c.h.b16 %v988
    %v1763 = vunpack.c.l.b16 %v989
    %v1764 = vunpack.c.h.b16 %v989
    %v1765 = vunpack.c.l.b16 %v990
    %v1766 = vunpack.c.h.b16 %v990
    %v1767 = vunpack.c.l.b16 %v991
    %v1768 = vunpack.c.h.b16 %v991
    %v1769 = vunpack.c.l.b16 %v992
    %v1770 = vunpack.c.h.b16 %v992
    %v1771 = vunpack.c.l.b16 %v993
    %v1772 = vunpack.c.h.b16 %v993
    %v1773 = vunpack.c.l.b16 %v994
    %v1774 = vunpack.c.h.b16 %v994
    %v1775 = vunpack.c.l.b16 %v995
    %v1776 = vunpack.c.h.b16 %v995
    %v1777 = vunpack.c.l.b16 %v996
    %v1778 = vunpack.c.h.b16 %v996
    %v1779 = vunpack.c.l.b16 %v997
    %v1780 = vunpack.c.h.b16 %v997
    %v1781 = vunpack.c.l.b16 %v998
    %v1782 = vunpack.c.h.b16 %v998
    %v1783 = vunpack.c.l.b16 %v999
    %v1784 = vunpack.c.h.b16 %v999
    %v1785 = vunpack.c.l.b16 %v1000
    %v1786 = vunpack.c.h.b16 %v1000
    %v1787 = vunpack.c.l.b16 %v1001
    %v1788 = vunpack.c.h.b16 %v1001
    %v1789 = vunpack.c.l.b16 %v1002
    %v1790 = vunpack.c.h.b16 %v1002
    %v1791 = vunpack.c.l.b16 %v1003
    %v1792 = vunpack.c.h.b16 %v1003
    %v1793 = vunpack.c.l.b16 %v1004
    %v1794 = vunpack.c.h.b16 %v1004
    %v1795 = vunpack.c.l.b16 %v1005
    %v1796 = vunpack.c.h.b16 %v1005
    %v1797 = vunpack.c.l.b16 %v1006
    %v1798 = vunpack.c.h.b16 %v1006
    %v1799 = vunpack.c.l.b16 %v1007
    %v1800 = vunpack.c.h.b16 %v1007
    %v1801 = vunpack.c.l.b16 %v1008
    %v1802 = vunpack.c.h.b16 %v1008
    %v1803 = vunpack.c.l.b16 %v1009
    %v1804 = vunpack.c.h.b16 %v1009
    %v1805 = vunpack.c.l.b16 %v1010
    %v1806 = vunpack.c.h.b16 %v1010
    %v1807 = vunpack.c.l.b16 %v1011
    %v1808 = vunpack.c.h.b16 %v1011
    %v1809 = vunpack.c.l.b16 %v1012
    %v1810 = vunpack.c.h.b16 %v1012
    %v1811 = vunpack.c.l.b16 %v1013
    %v1812 = vunpack.c.h.b16 %v1013
    %v1813 = vunpack.c.l.b16 %v1014
    %v1814 = vunpack.c.h.b16 %v1014
    %v1815 = vunpack.c.l.b16 %v1015
    %v1816 = vunpack.c.h.b16 %v1015
    %v1817 = vunpack.c.l.b16 %v1016
    %v1818 = vunpack.c.h.b16 %v1016
    %v1819 = vunpack.c.l.b16 %v1017
    %v1820 = vunpack.c.h.b16 %v1017
    %v1821 = vunpack.c.l.b16 %v1018
    %v1822 = vunpack.c.h.b16 %v1018
    %v1823 = vunpack.c.l.b16 %v1019
    %v1824 = vunpack.c.h.b16 %v1019
    %v1825 = vunpack.c.l.b16 %v1020
    %v1826 = vunpack.c.h.b16 %v1020
    %v1827 = vunpack.c.l.b16 %v1021
    %v1828 = vunpack.c.h.b16 %v1021
    %v1829 = vunpack.c.l.b16 %v1022
    %v1830 = vunpack.c.h.b16 %v1022
    %v1831 = vunpack.c.l.b16 %v1023
    %v1832 = vunpack.c.h.b16 %v1023
    %v1833 = vunpack.c.l.b16 %v1024
    %v1834 = vunpack.c.h.b16 %v1024
    %v1835 = vpack.c.b16 %v1331, %v1323
    %v1836 = vpack.c.b16 %v1332, %v1324
    %v1837 = vpack.c.b16 %v1333, %v1325
    %v1838 = vpack.c.b16 %v1334, %v1326
    %v1839 = vpack.c.b16 %v1335, %v1327
    %v1840 = vpack.c.b16 %v1336, %v1328
    %v1841 = vpack.c.b16 %v1337, %v1329
    %v1842 = vpack.c.b16 %v1338, %v1330
    %v1843 = vpack.c.b16 %v1347, %v1339
    %v1844 = vpack.c.b16 %v1348, %v1340
    %v1845 = vpack.c.b16 %v1349, %v1341
    %v1846 = vpack.c.b16 %v1350, %v1342
    %v1847 = vpack.c.b16 %v1351, %v1343
    %v1848 = vpack.c.b16 %v1352, %v1344
    %v1849 = vpack.c.b16 %v1353, %v1345
    %v1850 = vpack.c.b16 %v1354, %v1346
    %v1851 = vpack.c.b16 %v1363, %v1355
    %v1852 = vpack.c.b16 %v1364, %v1356
    %v1853 = vpack.c.b16 %v1365, %v1357
    %v1854 = vpack.c.b16 %v1366, %v1358
    %v1855 = vpack.c.b16 %v1367, %v1359
    %v1856 = vpack.c.b16 %v1368, %v1360
    %v1857 = vpack.c.b16 %v1369, %v1361
    %v1858 = vpack.c.b16 %v1370, %v1362
    %v1859 = vpack.c.b16 %v1379, %v1371
    %v1860 = vpack.c.b16 %v1380, %v1372
    %v1861 = vpack.c.b16 %v1381, %v1373
    %v1862 = vpack.c.b16 %v1382, %v1374
    %v1863 = vpack.c.b16 %v1383, %v1375
    %v1864 = vpack.c.b16 %v1384, %v1376
    %v1865 = vpack.c.b16 %v1385, %v1377
    %v1866 = vpack.c.b16 %v1386, %v1378
    %v1867 = vpack.c.b16 %v1395, %v1387
    %v1868 = vpack.c.b16 %v1396, %v1388
    %v1869 = vpack.c.b16 %v1397, %v1389
    %v1870 = vpack.c.b16 %v1398, %v1390
    %v1871 = vpack.c.b16 %v1399, %v1391
    %v1872 = vpack.c.b16 %v1400, %v1392
    %v1873 = vpack.c.b16 %v1401, %v1393
    %v1874 = vpack.c.b16 %v1402, %v1394
    %v1875 = vpack.c.b16 %v1411, %v1403
    %v1876 = vpack.c.b16 %v1412, %v1404
    %v1877 = vpack.c.b16 %v1413, %v1405
    %v1878 = vpack.c.b16 %v1414, %v1406
    %v1879 = vpack.c.b16 %v1415, %v1407
    %v1880 = vpack.c.b16 %v1416, %v1408
    %v1881 = vpack.c.b16 %v1417, %v1409
    %v1882 = vpack.c.b16 %v1418, %v1410
    %v1883 = vpack.c.b16 %v1427, %v1419
    %v1884 = vpack.c.b16 %v1428, %v1420
    %v1885 = vpack.c.b16 %v1429, %v1421
    %v1886 = vpack.c.b16 %v1430, %v1422
    %v1887 = vpack.c.b16 %v1431, %v1423
    %v1888 = vpack.c.b16 %v1432, %v1424
    %v1889 = vpack.c.b16 %v1433, %v1425
    %v1890 = vpack.c.b16 %v1434, %v1426
    %v1891 = vpack.c.b16 %v1443, %v1435
    %v1892 = vpack.c.b16 %v1444, %v1436
    %v1893 = vpack.c.b16 %v1445, %v1437
    %v1894 = vpack.c.b16 %v1446, %v1438
    %v1895 = vpack.c.b16 %v1447, %v1439
    %v1896 = vpack.c.b16 %v1448, %v1440
    %v1897 = vpack.c.b16 %v1449, %v1441
    %v1898 = vpack.c.b16 %v1450, %v1442
    %v1899 = vpack.c.b16 %v1459, %v1451
    %v1900 = vpack.c.b16 %v1460, %v1452
    %v1901 = vpack.c.b16 %v1461, %v1453
    %v1902 = vpack.c.b16 %v1462, %v1454
    %v1903 = vpack.c.b16 %v1463, %v1455
    %v1904 = vpack.c.b16 %v1464, %v1456
    %v1905 = vpack.c.b16 %v1465, %v1457
    %v1906 = vpack.c.b16 %v1466, %v1458
    %v1907 = vpack.c.b16 %v1475, %v1467
    %v1908 = vpack.c.b16 %v1476, %v1468
    %v1909 = vpack.c.b16 %v1477, %v1469
    %v1910 = vpack.c.b16 %v1478, %v1470
    %v1911 = vpack.c.b16 %v1479, %v1471
    %v1912 = vpack.c.b16 %v1480, %v1472
    %v1913 = vpack.c.b16 %v1481, %v1473
    %v1914 = vpack.c.b16 %v1482, %v1474
    %v1915 = vpack.c.b16 %v1491, %v1483
    %v1916 = vpack.c.b16 %v1492, %v1484
    %v1917 = vpack.c.b16 %v1493, %v1485
    %v1918 = vpack.c.b16 %v1494, %v1486
    %v1919 = vpack.c.b16 %v1495, %v1487
    %v1920 = vpack.c.b16 %v1496, %v1488
    %v1921 = vpack.c.b16 %v1497, %v1489
    %v1922 = vpack.c.b16 %v1498, %v1490
    %v1923 = vpack.c.b16 %v1507, %v1499
    %v1924 = vpack.c.b16 %v1508, %v1500
    %v1925 = vpack.c.b16 %v1509, %v1501
    %v1926 = vpack.c.b16 %v1510, %v1502
    %v1927 = vpack.c.b16 %v1511, %v1503
    %v1928 = vpack.c.b16 %v1512, %v1504
    %v1929 = vpack.c.b16 %v1513, %v1505
    %v1930 = vpack.c.b16 %v1514, %v1506
    %v1931 = vpack.c.b16 %v1523, %v1515
    %v1932 = vpack.c.b16 %v1524, %v1516
    %v1933 = vpack.c.b16 %v1525, %v1517
    %v1934 = vpack.c.b16 %v1526, %v1518
    %v1935 = vpack.c.b16 %v1527, %v1519
    %v1936 = vpack.c.b16 %v1528, %v1520
    %v1937 = vpack.c.b16 %v1529, %v1521
    %v1938 = vpack.c.b16 %v1530, %v1522
    %v1939 = vpack.c.b16 %v1539, %v1531
    %v1940 = vpack.c.b16 %v1540, %v1532
    %v1941 = vpack.c.b16 %v1541, %v1533
    %v1942 = vpack.c.b16 %v1542, %v1534
    %v1943 = vpack.c.b16 %v1543, %v1535
    %v1944 = vpack.c.b16 %v1544, %v1536
    %v1945 = vpack.c.b16 %v1545, %v1537
    %v1946 = vpack.c.b16 %v1546, %v1538
    %v1947 = vpack.c.b16 %v1555, %v1547
    %v1948 = vpack.c.b16 %v1556, %v1548
    %v1949 = vpack.c.b16 %v1557, %v1549
    %v1950 = vpack.c.b16 %v1558, %v1550
    %v1951 = vpack.c.b16 %v1559, %v1551
    %v1952 = vpack.c.b16 %v1560, %v1552
    %v1953 = vpack.c.b16 %v1561, %v1553
    %v1954 = vpack.c.b16 %v1562, %v1554
    %v1955 = vpack.c.b16 %v1571, %v1563
    %v1956 = vpack.c.b16 %v1572, %v1564
    %v1957 = vpack.c.b16 %v1573, %v1565
    %v1958 = vpack.c.b16 %v1574, %v1566
    %v1959 = vpack.c.b16 %v1575, %v1567
    %v1960 = vpack.c.b16 %v1576, %v1568
    %v1961 = vpack.c.b16 %v1577, %v1569
    %v1962 = vpack.c.b16 %v1578, %v1570
    %v1963 = vpack.c.b16 %v1587, %v1579
    %v1964 = vpack.c.b16 %v1588, %v1580
    %v1965 = vpack.c.b16 %v1589, %v1581
    %v1966 = vpack.c.b16 %v1590, %v1582
    %v1967 = vpack.c.b16 %v1591, %v1583
    %v1968 = vpack.c.b16 %v1592, %v1584
    %v1969 = vpack.c.b16 %v1593, %v1585
    %v1970 = vpack.c.b16 %v1594, %v1586
    %v1971 = vpack.c.b16 %v1603, %v1595
    %v1972 = vpack.c.b16 %v1604, %v1596
    %v1973 = vpack.c.b16 %v1605, %v1597
    %v1974 = vpack.c.b16 %v1606, %v1598
    %v1975 = vpack.c.b16 %v1607, %v1599
    %v1976 = vpack.c.b16 %v1608, %v1600
    %v1977 = vpack.c.b16 %v1609, %v1601
    %v1978 = vpack.c.b16 %v1610, %v1602
    %v1979 = vpack.c.b16 %v1619, %v1611
    %v1980 = vpack.c.b16 %v1620, %v1612
    %v1981 = vpack.c.b16 %v1621, %v1613
    %v1982 = vpack.c.b16 %v1622, %v1614
    %v1983 = vpack.c.b16 %v1623, %v1615
    %v1984 = vpack.c.b16 %v1624, %v1616
    %v1985 = vpack.c.b16 %v1625, %v1617
    %v1986 = vpack.c.b16 %v1626, %v1618
    %v1987 = vpack.c.b16 %v1635, %v1627
    %v1988 = vpack.c.b16 %v1636, %v1628
    %v1989 = vpack.c.b16 %v1637, %v1629
    %v1990 = vpack.c.b16 %v1638, %v1630
    %v1991 = vpack.c.b16 %v1639, %v1631
    %v1992 = vpack.c.b16 %v1640, %v1632
    %v1993 = vpack.c.b16 %v1641, %v1633
    %v1994 = vpack.c.b16 %v1642, %v1634
    %v1995 = vpack.c.b16 %v1651, %v1643
    %v1996 = vpack.c.b16 %v1652, %v1644
    %v1997 = vpack.c.b16 %v1653, %v1645
    %v1998 = vpack.c.b16 %v1654, %v1646
    %v1999 = vpack.c.b16 %v1655, %v1647
    %v2000 = vpack.c.b16 %v1656, %v1648
    %v2001 = vpack.c.b16 %v1657, %v1649
    %v2002 = vpack.c.b16 %v1658, %v1650
    %v2003 = vpack.c.b16 %v1667, %v1659
    %v2004 = vpack.c.b16 %v1668, %v1660
    %v2005 = vpack.c.b16 %v1669, %v1661
    %v2006 = vpack.c.b16 %v1670, %v1662
    %v2007 = vpack.c.b16 %v1671, %v1663
    %v2008 = vpack.c.b16 %v1672, %v1664
    %v2009 = vpack.c.b16 %v1673, %v1665
    %v2010 = vpack.c.b16 %v1674, %v1666
    %v2011 = vpack.c.b16 %v1683, %v1675
    %v2012 = vpack.c.b16 %v1684, %v1676
    %v2013 = vpack.c.b16 %v1685, %v1677
    %v2014 = vpack.c.b16 %v1686, %v1678
    %v2015 = vpack.c.b16 %v1687, %v1679
    %v2016 = vpack.c.b16 %v1688, %v1680
    %v2017 = vpack.c.b16 %v1689, %v1681
    %v2018 = vpack.c.b16 %v1690, %v1682
    %v2019 = vpack.c.b16 %v1699, %v1691
    %v2020 = vpack.c.b16 %v1700, %v1692
    %v2021 = vpack.c.b16 %v1701, %v1693
    %v2022 = vpack.c.b16 %v1702, %v1694
    %v2023 = vpack.c.b16 %v1703, %v1695
    %v2024 = vpack.c.b16 %v1704, %v1696
    %v2025 = vpack.c.b16 %v1705, %v1697
    %v2026 = vpack.c.b16 %v1706, %v1698
    %v2027 = vpack.c.b16 %v1715, %v1707
    %v2028 = vpack.c.b16 %v1716, %v1708
    %v2029 = vpack.c.b16 %v1717, %v1709
    %v2030 = vpack.c.b16 %v1718, %v1710
    %v2031 = vpack.c.b16 %v1719, %v1711
    %v2032 = vpack.c.b16 %v1720, %v1712
    %v2033 = vpack.c.b16 %v1721, %v1713
    %v2034 = vpack.c.b16 %v1722, %v1714
    %v2035 = vpack.c.b16 %v1731, %v1723
    %v2036 = vpack.c.b16 %v1732, %v1724
    %v2037 = vpack.c.b16 %v1733, %v1725
    %v2038 = vpack.c.b16 %v1734, %v1726
    %v2039 = vpack.c.b16 %v1735, %v1727
    %v2040 = vpack.c.b16 %v1736, %v1728
    %v2041 = vpack.c.b16 %v1737, %v1729
    %v2042 = vpack.c.b16 %v1738, %v1730
    %v2043 = vpack.c.b16 %v1747, %v1739
    %v2044 = vpack.c.b16 %v1748, %v1740
    %v2045 = vpack.c.b16 %v1749, %v1741
    %v2046 = vpack.c.b16 %v1750, %v1742
    %v2047 = vpack.c.b16 %v1751, %v1743
    %v2048 = vpack.c.b16 %v1752, %v1744
    %v2049 = vpack.c.b16 %v1753, %v1745
    %v2050 = vpack.c.b16 %v1754, %v1746
    %v2051 = vpack.c.b16 %v1763, %v1755
    %v2052 = vpack.c.b16 %v1764, %v1756
    %v2053 = vpack.c.b16 %v1765, %v1757
    %v2054 = vpack.c.b16 %v1766, %v1758
    %v2055 = vpack.c.b16 %v1767, %v1759
    %v2056 = vpack.c.b16 %v1768, %v1760
    %v2057 = vpack.c.b16 %v1769, %v1761
    %v2058 = vpack.c.b16 %v1770, %v1762
    %v2059 = vpack.c.b16 %v1779, %v1771
    %v2060 = vpack.c.b16 %v1780, %v1772
    %v2061 = vpack.c.b16 %v1781, %v1773
    %v2062 = vpack.c.b16 %v1782, %v1774
    %v2063 = vpack.c.b16 %v1783, %v1775
    %v2064 = vpack.c.b16 %v1784, %v1776
    %v2065 = vpack.c.b16 %v1785, %v1777
    %v2066 = vpack.c.b16 %v1786, %v1778
    %v2067 = vpack.c.b16 %v1795, %v1787
    %v2068 = vpack.c.b16 %v1796, %v1788
    %v2069 = vpack.c.b16 %v1797, %v1789
    %v2070 = vpack.c.b16 %v1798, %v1790
    %v2071 = vpack.c.b16 %v1799, %v1791
    %v2072 = vpack.c.b16 %v1800, %v1792
    %v2073 = vpack.c.b16 %v1801, %v1793
    %v2074 = vpack.c.b16 %v1802, %v1794
    %v2075 = vpack.c.b16 %v1811, %v1803
    %v2076 = vpack.c.b16 %v1812, %v1804
    %v2077 = vpack.c.b16 %v1813, %v1805
    %v2078 = vpack.c.b16 %v1814, %v1806
    %v2079 = vpack.c.b16 %v1815, %v1807
    %v2080 = vpack.c.b16 %v1816, %v1808
    %v2081 = vpack.c.b16 %v1817, %v1809
    %v2082 = vpack.c.b16 %v1818, %v1810
    %v2083 = vpack.c.b16 %v1827, %v1819
    %v2084 = vpack.c.b16 %v1828, %v1820
    %v2085 = vpack.c.b16 %v1829, %v1821
    %v2086 = vpack.c.b16 %v1830, %v1822
    %v2087 = vpack.c.b16 %v1831, %v1823
    %v2088 = vpack.c.b16 %v1832, %v1824
    %v2089 = vpack.c.b16 %v1833, %v1825
    %v2090 = vpack.c.b16 %v1834, %v1826
    %2347 = vmatprep.subr.bf16.mxu0 %v1892
    %2348 = vmatpush1.bf16.msra.mxu0 %v1891
    %2349 = vmatprep.subr.bf16.mxu0 %v1884
    %2350 = vmatpush1.bf16.msra.mxu0 %v1883
    %2351 = vmatprep.subr.bf16.mxu0 %v1876
    %2352 = vmatpush1.bf16.msra.mxu0 %v1875
    %2353 = vmatprep.subr.bf16.mxu0 %v1868
    %2354 = vmatpush1.bf16.msra.mxu0 %v1867
    %2355 = vmatprep.subr.bf16.mxu0 %v1860
    %2356 = vmatpush1.bf16.msra.mxu0 %v1859
    %2357 = vmatprep.subr.bf16.mxu0 %v1852
    %2358 = vmatpush1.bf16.msra.mxu0 %v1851
    %2359 = vmatprep.subr.bf16.mxu0 %v1844
    %2360 = vmatpush1.bf16.msra.mxu0 %v1843
    %2361 = vmatprep.subr.bf16.mxu0 %v1836
    %2362 = vmatpush1.bf16.msra.mxu0 %v1835
    %2363 = vmatprep.subr.bf16.mxu0 %v1956
    %2364 = vmatpush2.bf16.msra.mxu0 %v1955
    %2365 = vmatprep.subr.bf16.mxu0 %v1948
    %2366 = vmatpush2.bf16.msra.mxu0 %v1947
    %2367 = vmatprep.subr.bf16.mxu0 %v1940
    %2368 = vmatpush2.bf16.msra.mxu0 %v1939
    %2369 = vmatprep.subr.bf16.mxu0 %v1932
    %2370 = vmatpush2.bf16.msra.mxu0 %v1931
    %2371 = vmatprep.subr.bf16.mxu0 %v1924
    %2372 = vmatpush2.bf16.msra.mxu0 %v1923
    %2373 = vmatprep.subr.bf16.mxu0 %v1916
    %2374 = vmatpush2.bf16.msra.mxu0 %v1915
    %2375 = vmatprep.subr.bf16.mxu0 %v1908
    %2376 = vmatpush2.bf16.msra.mxu0 %v1907
    %2377 = vmatprep.subr.bf16.mxu0 %v1900
    %2378 = vmatpush2.bf16.msra.mxu0 %v1899
    %2379 = vmatprep.mubr.bf16.mxu0 %v766
    %2380 = vmatmul.mubr.bf16.gmra.mxu0 %v765
    %v2381 = vpop.f32.mrf.mxu0
    %v2382 = vadd.f32 %v1030, %v2381
    %v2383 = vpop.f32.mrf.mxu0
    %v2384 = vadd.f32 %v1034, %v2383
    %v2385 = vpop.f32.mrf.mxu0
    %v2386 = vpop.f32.mrf.mxu0
    %2387 = vdwg.mxu0
    %2388 = vmatprep.subr.bf16.mxu0 %v2020
    %2389 = vmatpush1.bf16.msra.mxu0 %v2019
    %2390 = vmatprep.subr.bf16.mxu0 %v2012
    %2391 = vmatpush1.bf16.msra.mxu0 %v2011
    %2392 = vmatprep.subr.bf16.mxu0 %v2004
    %2393 = vmatpush1.bf16.msra.mxu0 %v2003
    %2394 = vmatprep.subr.bf16.mxu0 %v1996
    %2395 = vmatpush1.bf16.msra.mxu0 %v1995
    %2396 = vmatprep.subr.bf16.mxu0 %v1988
    %2397 = vmatpush1.bf16.msra.mxu0 %v1987
    %2398 = vmatprep.subr.bf16.mxu0 %v1980
    %2399 = vmatpush1.bf16.msra.mxu0 %v1979
    %2400 = vmatprep.subr.bf16.mxu0 %v1972
    %2401 = vmatpush1.bf16.msra.mxu0 %v1971
    %2402 = vmatprep.subr.bf16.mxu0 %v1964
    %2403 = vmatpush1.bf16.msra.mxu0 %v1963
    %2404 = vmatprep.subr.bf16.mxu0 %v2084
    %2405 = vmatpush2.bf16.msra.mxu0 %v2083
    %2406 = vmatprep.subr.bf16.mxu0 %v2076
    %2407 = vmatpush2.bf16.msra.mxu0 %v2075
    %2408 = vmatprep.subr.bf16.mxu0 %v2068
    %2409 = vmatpush2.bf16.msra.mxu0 %v2067
    %2410 = vmatprep.subr.bf16.mxu0 %v2060
    %2411 = vmatpush2.bf16.msra.mxu0 %v2059
    %2412 = vmatprep.subr.bf16.mxu0 %v2052
    %2413 = vmatpush2.bf16.msra.mxu0 %v2051
    %2414 = vmatprep.subr.bf16.mxu0 %v2044
    %2415 = vmatpush2.bf16.msra.mxu0 %v2043
    %2416 = vmatprep.subr.bf16.mxu0 %v2036
    %2417 = vmatpush2.bf16.msra.mxu0 %v2035
    %2418 = vmatprep.subr.bf16.mxu0 %v2028
    %2419 = vmatpush2.bf16.msra.mxu0 %v2027
    %2420 = vmatprep.mubr.bf16.mxu0 %v768
    %2421 = vmatmul.mubr.bf16.gmra.mxu0 %v767
    %v2422 = vpop.f32.mrf.mxu0
    %v2423 = vadd.f32 %v2382, %v2422
    %v2424 = vpop.f32.mrf.mxu0
    %v2425 = vadd.f32 %v2384, %v2424
    %v2426 = vpop.f32.mrf.mxu0
    %v2427 = vpop.f32.mrf.mxu0
    %2428 = vdwg.mxu0
    %2429 = vmatprep.subr.bf16.mxu0 %v1894
    %2430 = vmatpush1.bf16.msra.mxu0 %v1893
    %2431 = vmatprep.subr.bf16.mxu0 %v1886
    %2432 = vmatpush1.bf16.msra.mxu0 %v1885
    %2433 = vmatprep.subr.bf16.mxu0 %v1878
    %2434 = vmatpush1.bf16.msra.mxu0 %v1877
    %2435 = vmatprep.subr.bf16.mxu0 %v1870
    %2436 = vmatpush1.bf16.msra.mxu0 %v1869
    %2437 = vmatprep.subr.bf16.mxu0 %v1862
    %2438 = vmatpush1.bf16.msra.mxu0 %v1861
    %2439 = vmatprep.subr.bf16.mxu0 %v1854
    %2440 = vmatpush1.bf16.msra.mxu0 %v1853
    %2441 = vmatprep.subr.bf16.mxu0 %v1846
    %2442 = vmatpush1.bf16.msra.mxu0 %v1845
    %2443 = vmatprep.subr.bf16.mxu0 %v1838
    %2444 = vmatpush1.bf16.msra.mxu0 %v1837
    %2445 = vmatprep.subr.bf16.mxu0 %v1958
    %2446 = vmatpush2.bf16.msra.mxu0 %v1957
    %2447 = vmatprep.subr.bf16.mxu0 %v1950
    %2448 = vmatpush2.bf16.msra.mxu0 %v1949
    %2449 = vmatprep.subr.bf16.mxu0 %v1942
    %2450 = vmatpush2.bf16.msra.mxu0 %v1941
    %2451 = vmatprep.subr.bf16.mxu0 %v1934
    %2452 = vmatpush2.bf16.msra.mxu0 %v1933
    %2453 = vmatprep.subr.bf16.mxu0 %v1926
    %2454 = vmatpush2.bf16.msra.mxu0 %v1925
    %2455 = vmatprep.subr.bf16.mxu0 %v1918
    %2456 = vmatpush2.bf16.msra.mxu0 %v1917
    %2457 = vmatprep.subr.bf16.mxu0 %v1910
    %2458 = vmatpush2.bf16.msra.mxu0 %v1909
    %2459 = vmatprep.subr.bf16.mxu0 %v1902
    %2460 = vmatpush2.bf16.msra.mxu0 %v1901
    %2461 = vmatprep.mubr.bf16.mxu0 %v766
    %2462 = vmatmul.mubr.bf16.gmra.mxu0 %v765
    %v2463 = vpop.f32.mrf.mxu0
    %v2464 = vadd.f32 %v1038, %v2463
    %v2465 = vpop.f32.mrf.mxu0
    %v2466 = vadd.f32 %v1042, %v2465
    %v2467 = vpop.f32.mrf.mxu0
    %v2468 = vpop.f32.mrf.mxu0
    %2469 = vdwg.mxu0
    %2470 = vmatprep.subr.bf16.mxu0 %v2022
    %2471 = vmatpush1.bf16.msra.mxu0 %v2021
    %2472 = vmatprep.subr.bf16.mxu0 %v2014
    %2473 = vmatpush1.bf16.msra.mxu0 %v2013
    %2474 = vmatprep.subr.bf16.mxu0 %v2006
    %2475 = vmatpush1.bf16.msra.mxu0 %v2005
    %2476 = vmatprep.subr.bf16.mxu0 %v1998
    %2477 = vmatpush1.bf16.msra.mxu0 %v1997
    %2478 = vmatprep.subr.bf16.mxu0 %v1990
    %2479 = vmatpush1.bf16.msra.mxu0 %v1989
    %2480 = vmatprep.subr.bf16.mxu0 %v1982
    %2481 = vmatpush1.bf16.msra.mxu0 %v1981
    %2482 = vmatprep.subr.bf16.mxu0 %v1974
    %2483 = vmatpush1.bf16.msra.mxu0 %v1973
    %2484 = vmatprep.subr.bf16.mxu0 %v1966
    %2485 = vmatpush1.bf16.msra.mxu0 %v1965
    %2486 = vmatprep.subr.bf16.mxu0 %v2086
    %2487 = vmatpush2.bf16.msra.mxu0 %v2085
    %2488 = vmatprep.subr.bf16.mxu0 %v2078
    %2489 = vmatpush2.bf16.msra.mxu0 %v2077
    %2490 = vmatprep.subr.bf16.mxu0 %v2070
    %2491 = vmatpush2.bf16.msra.mxu0 %v2069
    %2492 = vmatprep.subr.bf16.mxu0 %v2062
    %2493 = vmatpush2.bf16.msra.mxu0 %v2061
    %2494 = vmatprep.subr.bf16.mxu0 %v2054
    %2495 = vmatpush2.bf16.msra.mxu0 %v2053
    %2496 = vmatprep.subr.bf16.mxu0 %v2046
    %2497 = vmatpush2.bf16.msra.mxu0 %v2045
    %2498 = vmatprep.subr.bf16.mxu0 %v2038
    %2499 = vmatpush2.bf16.msra.mxu0 %v2037
    %2500 = vmatprep.subr.bf16.mxu0 %v2030
    %2501 = vmatpush2.bf16.msra.mxu0 %v2029
    %2502 = vmatprep.mubr.bf16.mxu0 %v768
    %2503 = vmatmul.mubr.bf16.gmra.mxu0 %v767
    %v2504 = vpop.f32.mrf.mxu0
    %v2505 = vadd.f32 %v2464, %v2504
    %v2506 = vpop.f32.mrf.mxu0
    %v2507 = vadd.f32 %v2466, %v2506
    %v2508 = vpop.f32.mrf.mxu0
    %v2509 = vpop.f32.mrf.mxu0
    %2510 = vdwg.mxu0
    %2511 = vmatprep.subr.bf16.mxu0 %v1896
    %2512 = vmatpush1.bf16.msra.mxu0 %v1895
    %2513 = vmatprep.subr.bf16.mxu0 %v1888
    %2514 = vmatpush1.bf16.msra.mxu0 %v1887
    %2515 = vmatprep.subr.bf16.mxu0 %v1880
    %2516 = vmatpush1.bf16.msra.mxu0 %v1879
    %2517 = vmatprep.subr.bf16.mxu0 %v1872
    %2518 = vmatpush1.bf16.msra.mxu0 %v1871
    %2519 = vmatprep.subr.bf16.mxu0 %v1864
    %2520 = vmatpush1.bf16.msra.mxu0 %v1863
    %2521 = vmatprep.subr.bf16.mxu0 %v1856
    %2522 = vmatpush1.bf16.msra.mxu0 %v1855
    %2523 = vmatprep.subr.bf16.mxu0 %v1848
    %2524 = vmatpush1.bf16.msra.mxu0 %v1847
    %2525 = vmatprep.subr.bf16.mxu0 %v1840
    %2526 = vmatpush1.bf16.msra.mxu0 %v1839
    %2527 = vmatprep.subr.bf16.mxu0 %v1960
    %2528 = vmatpush2.bf16.msra.mxu0 %v1959
    %2529 = vmatprep.subr.bf16.mxu0 %v1952
    %2530 = vmatpush2.bf16.msra.mxu0 %v1951
    %2531 = vmatprep.subr.bf16.mxu0 %v1944
    %2532 = vmatpush2.bf16.msra.mxu0 %v1943
    %2533 = vmatprep.subr.bf16.mxu0 %v1936
    %2534 = vmatpush2.bf16.msra.mxu0 %v1935
    %2535 = vmatprep.subr.bf16.mxu0 %v1928
    %2536 = vmatpush2.bf16.msra.mxu0 %v1927
    %2537 = vmatprep.subr.bf16.mxu0 %v1920
    %2538 = vmatpush2.bf16.msra.mxu0 %v1919
    %2539 = vmatprep.subr.bf16.mxu0 %v1912
    %2540 = vmatpush2.bf16.msra.mxu0 %v1911
    %2541 = vmatprep.subr.bf16.mxu0 %v1904
    %2542 = vmatpush2.bf16.msra.mxu0 %v1903
    %2543 = vmatprep.mubr.bf16.mxu0 %v766
    %2544 = vmatmul.mubr.bf16.gmra.mxu0 %v765
    %v2545 = vpop.f32.mrf.mxu0
    %v2546 = vadd.f32 %v1046, %v2545
    %v2547 = vpop.f32.mrf.mxu0
    %v2548 = vadd.f32 %v1050, %v2547
    %v2549 = vpop.f32.mrf.mxu0
    %v2550 = vpop.f32.mrf.mxu0
    %2551 = vdwg.mxu0
    %2552 = vmatprep.subr.bf16.mxu0 %v2024
    %2553 = vmatpush1.bf16.msra.mxu0 %v2023
    %2554 = vmatprep.subr.bf16.mxu0 %v2016
    %2555 = vmatpush1.bf16.msra.mxu0 %v2015
    %2556 = vmatprep.subr.bf16.mxu0 %v2008
    %2557 = vmatpush1.bf16.msra.mxu0 %v2007
    %2558 = vmatprep.subr.bf16.mxu0 %v2000
    %2559 = vmatpush1.bf16.msra.mxu0 %v1999
    %2560 = vmatprep.subr.bf16.mxu0 %v1992
    %2561 = vmatpush1.bf16.msra.mxu0 %v1991
    %2562 = vmatprep.subr.bf16.mxu0 %v1984
    %2563 = vmatpush1.bf16.msra.mxu0 %v1983
    %2564 = vmatprep.subr.bf16.mxu0 %v1976
    %2565 = vmatpush1.bf16.msra.mxu0 %v1975
    %2566 = vmatprep.subr.bf16.mxu0 %v1968
    %2567 = vmatpush1.bf16.msra.mxu0 %v1967
    %2568 = vmatprep.subr.bf16.mxu0 %v2088
    %2569 = vmatpush2.bf16.msra.mxu0 %v2087
    %2570 = vmatprep.subr.bf16.mxu0 %v2080
    %2571 = vmatpush2.bf16.msra.mxu0 %v2079
    %2572 = vmatprep.subr.bf16.mxu0 %v2072
    %2573 = vmatpush2.bf16.msra.mxu0 %v2071
    %2574 = vmatprep.subr.bf16.mxu0 %v2064
    %2575 = vmatpush2.bf16.msra.mxu0 %v2063
    %2576 = vmatprep.subr.bf16.mxu0 %v2056
    %2577 = vmatpush2.bf16.msra.mxu0 %v2055
    %2578 = vmatprep.subr.bf16.mxu0 %v2048
    %2579 = vmatpush2.bf16.msra.mxu0 %v2047
    %2580 = vmatprep.subr.bf16.mxu0 %v2040
    %2581 = vmatpush2.bf16.msra.mxu0 %v2039
    %2582 = vmatprep.subr.bf16.mxu0 %v2032
    %2583 = vmatpush2.bf16.msra.mxu0 %v2031
    %2584 = vmatprep.mubr.bf16.mxu0 %v768
    %2585 = vmatmul.mubr.bf16.gmra.mxu0 %v767
    %v2586 = vpop.f32.mrf.mxu0
    %v2587 = vadd.f32 %v2546, %v2586
    %v2588 = vpop.f32.mrf.mxu0
    %v2589 = vadd.f32 %v2548, %v2588
    %v2590 = vpop.f32.mrf.mxu0
    %v2591 = vpop.f32.mrf.mxu0
    %2592 = vdwg.mxu0
    %2593 = vmatprep.subr.bf16.mxu0 %v1898
    %2594 = vmatpush1.bf16.msra.mxu0 %v1897
    %2595 = vmatprep.subr.bf16.mxu0 %v1890
    %2596 = vmatpush1.bf16.msra.mxu0 %v1889
    %2597 = vmatprep.subr.bf16.mxu0 %v1882
    %2598 = vmatpush1.bf16.msra.mxu0 %v1881
    %2599 = vmatprep.subr.bf16.mxu0 %v1874
    %2600 = vmatpush1.bf16.msra.mxu0 %v1873
    %2601 = vmatprep.subr.bf16.mxu0 %v1866
    %2602 = vmatpush1.bf16.msra.mxu0 %v1865
    %2603 = vmatprep.subr.bf16.mxu0 %v1858
    %2604 = vmatpush1.bf16.msra.mxu0 %v1857
    %2605 = vmatprep.subr.bf16.mxu0 %v1850
    %2606 = vmatpush1.bf16.msra.mxu0 %v1849
    %2607 = vmatprep.subr.bf16.mxu0 %v1842
    %2608 = vmatpush1.bf16.msra.mxu0 %v1841
    %2609 = vmatprep.subr.bf16.mxu0 %v1962
    %2610 = vmatpush2.bf16.msra.mxu0 %v1961
    %2611 = vmatprep.subr.bf16.mxu0 %v1954
    %2612 = vmatpush2.bf16.msra.mxu0 %v1953
    %2613 = vmatprep.subr.bf16.mxu0 %v1946
    %2614 = vmatpush2.bf16.msra.mxu0 %v1945
    %2615 = vmatprep.subr.bf16.mxu0 %v1938
    %2616 = vmatpush2.bf16.msra.mxu0 %v1937
    %2617 = vmatprep.subr.bf16.mxu0 %v1930
    %2618 = vmatpush2.bf16.msra.mxu0 %v1929
    %2619 = vmatprep.subr.bf16.mxu0 %v1922
    %2620 = vmatpush2.bf16.msra.mxu0 %v1921
    %2621 = vmatprep.subr.bf16.mxu0 %v1914
    %2622 = vmatpush2.bf16.msra.mxu0 %v1913
    %2623 = vmatprep.subr.bf16.mxu0 %v1906
    %2624 = vmatpush2.bf16.msra.mxu0 %v1905
    %2625 = vmatprep.mubr.bf16.mxu0 %v766
    %2626 = vmatmul.mubr.bf16.gmra.mxu0 %v765
    %v2627 = vpop.f32.mrf.mxu0
    %v2628 = vadd.f32 %v1054, %v2627
    %v2629 = vpop.f32.mrf.mxu0
    %v2630 = vadd.f32 %v1058, %v2629
    %v2631 = vpop.f32.mrf.mxu0
    %v2632 = vpop.f32.mrf.mxu0
    %2633 = vdwg.mxu0
    %2634 = vmatprep.subr.bf16.mxu0 %v2026
    %2635 = vmatpush1.bf16.msra.mxu0 %v2025
    %2636 = vmatprep.subr.bf16.mxu0 %v2018
    %2637 = vmatpush1.bf16.msra.mxu0 %v2017
    %2638 = vmatprep.subr.bf16.mxu0 %v2010
    %2639 = vmatpush1.bf16.msra.mxu0 %v2009
    %2640 = vmatprep.subr.bf16.mxu0 %v2002
    %2641 = vmatpush1.bf16.msra.mxu0 %v2001
    %2642 = vmatprep.subr.bf16.mxu0 %v1994
    %2643 = vmatpush1.bf16.msra.mxu0 %v1993
    %2644 = vmatprep.subr.bf16.mxu0 %v1986
    %2645 = vmatpush1.bf16.msra.mxu0 %v1985
    %2646 = vmatprep.subr.bf16.mxu0 %v1978
    %2647 = vmatpush1.bf16.msra.mxu0 %v1977
    %2648 = vmatprep.subr.bf16.mxu0 %v1970
    %2649 = vmatpush1.bf16.msra.mxu0 %v1969
    %2650 = vmatprep.subr.bf16.mxu0 %v2090
    %2651 = vmatpush2.bf16.msra.mxu0 %v2089
    %2652 = vmatprep.subr.bf16.mxu0 %v2082
    %2653 = vmatpush2.bf16.msra.mxu0 %v2081
    %2654 = vmatprep.subr.bf16.mxu0 %v2074
    %2655 = vmatpush2.bf16.msra.mxu0 %v2073
    %2656 = vmatprep.subr.bf16.mxu0 %v2066
    %2657 = vmatpush2.bf16.msra.mxu0 %v2065
    %2658 = vmatprep.subr.bf16.mxu0 %v2058
    %2659 = vmatpush2.bf16.msra.mxu0 %v2057
    %2660 = vmatprep.subr.bf16.mxu0 %v2050
    %2661 = vmatpush2.bf16.msra.mxu0 %v2049
    %2662 = vmatprep.subr.bf16.mxu0 %v2042
    %2663 = vmatpush2.bf16.msra.mxu0 %v2041
    %2664 = vmatprep.subr.bf16.mxu0 %v2034
    %2665 = vmatpush2.bf16.msra.mxu0 %v2033
    %2666 = vmatprep.mubr.bf16.mxu0 %v768
    %2667 = vmatmul.mubr.bf16.gmra.mxu0 %v767
    %v2668 = vpop.f32.mrf.mxu0
    %v2669 = vadd.f32 %v2628, %v2668
    %v2670 = vpop.f32.mrf.mxu0
    %v2671 = vadd.f32 %v2630, %v2670
    %v2672 = vpop.f32.mrf.mxu0
    %v2673 = vpop.f32.mrf.mxu0
    %2674 = vdwg.mxu0
    %v2675 = vpack.c.bf16 %v2423, %v2423
    %v2676 = vpack.c.bf16 %v2425, %v2425
    %v2677 = vpack.c.bf16 %v2505, %v2505
    %v2678 = vpack.c.bf16 %v2507, %v2507
    %v2679 = vpack.c.bf16 %v2587, %v2587
    %v2680 = vpack.c.bf16 %v2589, %v2589
    %v2681 = vpack.c.bf16 %v2669, %v2669
    %v2682 = vpack.c.bf16 %v2671, %v2671
    %v2683 = vmul.bf16 %v2675, 1045249613
    %v2684 = vmul.bf16 %v2676, 1045249613
    %v2685 = vmul.bf16 %v2677, 1045249613
    %v2686 = vmul.bf16 %v2678, 1045249613
    %v2687 = vmul.bf16 %v2679, 1045249613
    %v2688 = vmul.bf16 %v2680, 1045249613
    %v2689 = vmul.bf16 %v2681, 1045249613
    %v2690 = vmul.bf16 %v2682, 1045249613
    %v2691 = vmax.bf16 %v2675, %v2683
    %v2692 = vmax.bf16 %v2676, %v2684
    %v2693 = vmax.bf16 %v2677, %v2685
    %v2694 = vmax.bf16 %v2678, %v2686
    %v2695 = vmax.bf16 %v2679, %v2687
    %v2696 = vmax.bf16 %v2680, %v2688
    %v2697 = vmax.bf16 %v2681, %v2689
    %v2698 = vmax.bf16 %v2682, %v2690
    %v2699 = vld [vmem:[#allocation11] sm:$0xf]
    %v2700 = vld [vmem:[#allocation11 + $0x4] sm:$0xf]
    %v2701 = vld [vmem:[#allocation11 + $0x8] sm:$0xf]
    %v2702 = vld [vmem:[#allocation11 + $0xc] sm:$0xf]
    %v2703 = vld [vmem:[#allocation11 + $0x10] sm:$0xf]
    %v2704 = vld [vmem:[#allocation11 + $0x14] sm:$0xf]
    %v2705 = vld [vmem:[#allocation11 + $0x18] sm:$0xf]
    %v2706 = vld [vmem:[#allocation11 + $0x1c] sm:$0xf]
    %v2707 = vld [vmem:[#allocation11 + $0x20] sm:$0xf]
    %v2708 = vld [vmem:[#allocation11 + $0x24] sm:$0xf]
    %v2709 = vld [vmem:[#allocation11 + $0x28] sm:$0xf]
    %v2710 = vld [vmem:[#allocation11 + $0x2c] sm:$0xf]
    %v2711 = vld [vmem:[#allocation11 + $0x30] sm:$0xf]
    %v2712 = vld [vmem:[#allocation11 + $0x34] sm:$0xf]
    %v2713 = vld [vmem:[#allocation11 + $0x38] sm:$0xf]
    %v2714 = vld [vmem:[#allocation11 + $0x3c] sm:$0xf]
    %v2715 = vld [vmem:[#allocation11 + $0x40] sm:$0xf]
    %v2716 = vld [vmem:[#allocation11 + $0x44] sm:$0xf]
    %v2717 = vld [vmem:[#allocation11 + $0x48] sm:$0xf]
    %v2718 = vld [vmem:[#allocation11 + $0x4c] sm:$0xf]
    %v2719 = vld [vmem:[#allocation11 + $0x50] sm:$0xf]
    %v2720 = vld [vmem:[#allocation11 + $0x54] sm:$0xf]
    %v2721 = vld [vmem:[#allocation11 + $0x58] sm:$0xf]
    %v2722 = vld [vmem:[#allocation11 + $0x5c] sm:$0xf]
    %v2723 = vld [vmem:[#allocation11 + $0x60] sm:$0xf]
    %v2724 = vld [vmem:[#allocation11 + $0x64] sm:$0xf]
    %v2725 = vld [vmem:[#allocation11 + $0x68] sm:$0xf]
    %v2726 = vld [vmem:[#allocation11 + $0x6c] sm:$0xf]
    %v2727 = vld [vmem:[#allocation11 + $0x70] sm:$0xf]
    %v2728 = vld [vmem:[#allocation11 + $0x74] sm:$0xf]
    %v2729 = vld [vmem:[#allocation11 + $0x78] sm:$0xf]
    %v2730 = vld [vmem:[#allocation11 + $0x7c] sm:$0xf]
    %v2731 = vld [vmem:[#allocation11 + $0x80] sm:$0xf]
    %v2732 = vld [vmem:[#allocation11 + $0x84] sm:$0xf]
    %v2733 = vld [vmem:[#allocation11 + $0x88] sm:$0xf]
    %v2734 = vld [vmem:[#allocation11 + $0x8c] sm:$0xf]
    %v2735 = vld [vmem:[#allocation11 + $0x90] sm:$0xf]
    %v2736 = vld [vmem:[#allocation11 + $0x94] sm:$0xf]
    %v2737 = vld [vmem:[#allocation11 + $0x98] sm:$0xf]
    %v2738 = vld [vmem:[#allocation11 + $0x9c] sm:$0xf]
    %v2739 = vld [vmem:[#allocation11 + $0xa0] sm:$0xf]
    %v2740 = vld [vmem:[#allocation11 + $0xa4] sm:$0xf]
    %v2741 = vld [vmem:[#allocation11 + $0xa8] sm:$0xf]
    %v2742 = vld [vmem:[#allocation11 + $0xac] sm:$0xf]
    %v2743 = vld [vmem:[#allocation11 + $0xb0] sm:$0xf]
    %v2744 = vld [vmem:[#allocation11 + $0xb4] sm:$0xf]
    %v2745 = vld [vmem:[#allocation11 + $0xb8] sm:$0xf]
    %v2746 = vld [vmem:[#allocation11 + $0xbc] sm:$0xf]
    %v2747 = vld [vmem:[#allocation11 + $0xc0] sm:$0xf]
    %v2748 = vld [vmem:[#allocation11 + $0xc4] sm:$0xf]
    %v2749 = vld [vmem:[#allocation11 + $0xc8] sm:$0xf]
    %v2750 = vld [vmem:[#allocation11 + $0xcc] sm:$0xf]
    %v2751 = vld [vmem:[#allocation11 + $0xd0] sm:$0xf]
    %v2752 = vld [vmem:[#allocation11 + $0xd4] sm:$0xf]
    %v2753 = vld [vmem:[#allocation11 + $0xd8] sm:$0xf]
    %v2754 = vld [vmem:[#allocation11 + $0xdc] sm:$0xf]
    %v2755 = vld [vmem:[#allocation11 + $0xe0] sm:$0xf]
    %v2756 = vld [vmem:[#allocation11 + $0xe4] sm:$0xf]
    %v2757 = vld [vmem:[#allocation11 + $0xe8] sm:$0xf]
    %v2758 = vld [vmem:[#allocation11 + $0xec] sm:$0xf]
    %v2759 = vld [vmem:[#allocation11 + $0xf0] sm:$0xf]
    %v2760 = vld [vmem:[#allocation11 + $0xf4] sm:$0xf]
    %v2761 = vld [vmem:[#allocation11 + $0xf8] sm:$0xf]
    %v2762 = vld [vmem:[#allocation11 + $0xfc] sm:$0xf]
    %v2763 = vld [vmem:[#allocation11 + $0x100] sm:$0xf]
    %v2764 = vld [vmem:[#allocation11 + $0x104] sm:$0xf]
    %v2765 = vld [vmem:[#allocation11 + $0x108] sm:$0xf]
    %v2766 = vld [vmem:[#allocation11 + $0x10c] sm:$0xf]
    %v2767 = vld [vmem:[#allocation11 + $0x110] sm:$0xf]
    %v2768 = vld [vmem:[#allocation11 + $0x114] sm:$0xf]
    %v2769 = vld [vmem:[#allocation11 + $0x118] sm:$0xf]
    %v2770 = vld [vmem:[#allocation11 + $0x11c] sm:$0xf]
    %v2771 = vld [vmem:[#allocation11 + $0x120] sm:$0xf]
    %v2772 = vld [vmem:[#allocation11 + $0x124] sm:$0xf]
    %v2773 = vld [vmem:[#allocation11 + $0x128] sm:$0xf]
    %v2774 = vld [vmem:[#allocation11 + $0x12c] sm:$0xf]
    %v2775 = vld [vmem:[#allocation11 + $0x130] sm:$0xf]
    %v2776 = vld [vmem:[#allocation11 + $0x134] sm:$0xf]
    %v2777 = vld [vmem:[#allocation11 + $0x138] sm:$0xf]
    %v2778 = vld [vmem:[#allocation11 + $0x13c] sm:$0xf]
    %v2779 = vld [vmem:[#allocation11 + $0x140] sm:$0xf]
    %v2780 = vld [vmem:[#allocation11 + $0x144] sm:$0xf]
    %v2781 = vld [vmem:[#allocation11 + $0x148] sm:$0xf]
    %v2782 = vld [vmem:[#allocation11 + $0x14c] sm:$0xf]
    %v2783 = vld [vmem:[#allocation11 + $0x150] sm:$0xf]
    %v2784 = vld [vmem:[#allocation11 + $0x154] sm:$0xf]
    %v2785 = vld [vmem:[#allocation11 + $0x158] sm:$0xf]
    %v2786 = vld [vmem:[#allocation11 + $0x15c] sm:$0xf]
    %v2787 = vld [vmem:[#allocation11 + $0x160] sm:$0xf]
    %v2788 = vld [vmem:[#allocation11 + $0x164] sm:$0xf]
    %v2789 = vld [vmem:[#allocation11 + $0x168] sm:$0xf]
    %v2790 = vld [vmem:[#allocation11 + $0x16c] sm:$0xf]
    %v2791 = vld [vmem:[#allocation11 + $0x170] sm:$0xf]
    %v2792 = vld [vmem:[#allocation11 + $0x174] sm:$0xf]
    %v2793 = vld [vmem:[#allocation11 + $0x178] sm:$0xf]
    %v2794 = vld [vmem:[#allocation11 + $0x17c] sm:$0xf]
    %v2795 = vld [vmem:[#allocation11 + $0x180] sm:$0xf]
    %v2796 = vld [vmem:[#allocation11 + $0x184] sm:$0xf]
    %v2797 = vld [vmem:[#allocation11 + $0x188] sm:$0xf]
    %v2798 = vld [vmem:[#allocation11 + $0x18c] sm:$0xf]
    %v2799 = vld [vmem:[#allocation11 + $0x190] sm:$0xf]
    %v2800 = vld [vmem:[#allocation11 + $0x194] sm:$0xf]
    %v2801 = vld [vmem:[#allocation11 + $0x198] sm:$0xf]
    %v2802 = vld [vmem:[#allocation11 + $0x19c] sm:$0xf]
    %v2803 = vld [vmem:[#allocation11 + $0x1a0] sm:$0xf]
    %v2804 = vld [vmem:[#allocation11 + $0x1a4] sm:$0xf]
    %v2805 = vld [vmem:[#allocation11 + $0x1a8] sm:$0xf]
    %v2806 = vld [vmem:[#allocation11 + $0x1ac] sm:$0xf]
    %v2807 = vld [vmem:[#allocation11 + $0x1b0] sm:$0xf]
    %v2808 = vld [vmem:[#allocation11 + $0x1b4] sm:$0xf]
    %v2809 = vld [vmem:[#allocation11 + $0x1b8] sm:$0xf]
    %v2810 = vld [vmem:[#allocation11 + $0x1bc] sm:$0xf]
    %v2811 = vld [vmem:[#allocation11 + $0x1c0] sm:$0xf]
    %v2812 = vld [vmem:[#allocation11 + $0x1c4] sm:$0xf]
    %v2813 = vld [vmem:[#allocation11 + $0x1c8] sm:$0xf]
    %v2814 = vld [vmem:[#allocation11 + $0x1cc] sm:$0xf]
    %v2815 = vld [vmem:[#allocation11 + $0x1d0] sm:$0xf]
    %v2816 = vld [vmem:[#allocation11 + $0x1d4] sm:$0xf]
    %v2817 = vld [vmem:[#allocation11 + $0x1d8] sm:$0xf]
    %v2818 = vld [vmem:[#allocation11 + $0x1dc] sm:$0xf]
    %v2819 = vld [vmem:[#allocation11 + $0x1e0] sm:$0xf]
    %v2820 = vld [vmem:[#allocation11 + $0x1e4] sm:$0xf]
    %v2821 = vld [vmem:[#allocation11 + $0x1e8] sm:$0xf]
    %v2822 = vld [vmem:[#allocation11 + $0x1ec] sm:$0xf]
    %v2823 = vld [vmem:[#allocation11 + $0x1f0] sm:$0xf]
    %v2824 = vld [vmem:[#allocation11 + $0x1f4] sm:$0xf]
    %v2825 = vld [vmem:[#allocation11 + $0x1f8] sm:$0xf]
    %v2826 = vld [vmem:[#allocation11 + $0x1fc] sm:$0xf]
    %v2827 = vld [vmem:[%s8] sm:$0x1]
    %v2829 = vlaneseq
    %v2830 = vshrl.u32 %v2829, 7
    %v2831 = vsub.s32 0, %v2830
    %v2832 = vrot.slane %v2827, %v2831
    %v2962 = vunpack.c.l.b16 %v2699
    %v2963 = vunpack.c.l.b16 %v2700
    %v2964 = vunpack.c.l.b16 %v2701
    %v2965 = vunpack.c.l.b16 %v2702
    %v2966 = vunpack.c.l.b16 %v2703
    %v2967 = vunpack.c.l.b16 %v2704
    %v2968 = vunpack.c.l.b16 %v2705
    %v2969 = vunpack.c.l.b16 %v2706
    %v2970 = vunpack.c.l.b16 %v2707
    %v2971 = vunpack.c.l.b16 %v2708
    %v2972 = vunpack.c.l.b16 %v2709
    %v2973 = vunpack.c.l.b16 %v2710
    %v2974 = vunpack.c.l.b16 %v2711
    %v2975 = vunpack.c.l.b16 %v2712
    %v2976 = vunpack.c.l.b16 %v2713
    %v2977 = vunpack.c.l.b16 %v2714
    %v2978 = vunpack.c.l.b16 %v2715
    %v2979 = vunpack.c.l.b16 %v2716
    %v2980 = vunpack.c.l.b16 %v2717
    %v2981 = vunpack.c.l.b16 %v2718
    %v2982 = vunpack.c.l.b16 %v2719
    %v2983 = vunpack.c.l.b16 %v2720
    %v2984 = vunpack.c.l.b16 %v2721
    %v2985 = vunpack.c.l.b16 %v2722
    %v2986 = vunpack.c.l.b16 %v2723
    %v2987 = vunpack.c.l.b16 %v2724
    %v2988 = vunpack.c.l.b16 %v2725
    %v2989 = vunpack.c.l.b16 %v2726
    %v2990 = vunpack.c.l.b16 %v2727
    %v2991 = vunpack.c.l.b16 %v2728
    %v2992 = vunpack.c.l.b16 %v2729
    %v2993 = vunpack.c.l.b16 %v2730
    %v2994 = vunpack.c.l.b16 %v2731
    %v2995 = vunpack.c.l.b16 %v2732
    %v2996 = vunpack.c.l.b16 %v2733
    %v2997 = vunpack.c.l.b16 %v2734
    %v2998 = vunpack.c.l.b16 %v2735
    %v2999 = vunpack.c.l.b16 %v2736
    %v3000 = vunpack.c.l.b16 %v2737
    %v3001 = vunpack.c.l.b16 %v2738
    %v3002 = vunpack.c.l.b16 %v2739
    %v3003 = vunpack.c.l.b16 %v2740
    %v3004 = vunpack.c.l.b16 %v2741
    %v3005 = vunpack.c.l.b16 %v2742
    %v3006 = vunpack.c.l.b16 %v2743
    %v3007 = vunpack.c.l.b16 %v2744
    %v3008 = vunpack.c.l.b16 %v2745
    %v3009 = vunpack.c.l.b16 %v2746
    %v3010 = vunpack.c.l.b16 %v2747
    %v3011 = vunpack.c.l.b16 %v2748
    %v3012 = vunpack.c.l.b16 %v2749
    %v3013 = vunpack.c.l.b16 %v2750
    %v3014 = vunpack.c.l.b16 %v2751
    %v3015 = vunpack.c.l.b16 %v2752
    %v3016 = vunpack.c.l.b16 %v2753
    %v3017 = vunpack.c.l.b16 %v2754
    %v3018 = vunpack.c.l.b16 %v2755
    %v3019 = vunpack.c.l.b16 %v2756
    %v3020 = vunpack.c.l.b16 %v2757
    %v3021 = vunpack.c.l.b16 %v2758
    %v3022 = vunpack.c.l.b16 %v2759
    %v3023 = vunpack.c.l.b16 %v2760
    %v3024 = vunpack.c.l.b16 %v2761
    %v3025 = vunpack.c.l.b16 %v2762
    %v3026 = vunpack.c.l.b16 %v2763
    %v3027 = vunpack.c.l.b16 %v2764
    %v3028 = vunpack.c.l.b16 %v2765
    %v3029 = vunpack.c.l.b16 %v2766
    %v3030 = vunpack.c.l.b16 %v2767
    %v3031 = vunpack.c.l.b16 %v2768
    %v3032 = vunpack.c.l.b16 %v2769
    %v3033 = vunpack.c.l.b16 %v2770
    %v3034 = vunpack.c.l.b16 %v2771
    %v3035 = vunpack.c.l.b16 %v2772
    %v3036 = vunpack.c.l.b16 %v2773
    %v3037 = vunpack.c.l.b16 %v2774
    %v3038 = vunpack.c.l.b16 %v2775
    %v3039 = vunpack.c.l.b16 %v2776
    %v3040 = vunpack.c.l.b16 %v2777
    %v3041 = vunpack.c.l.b16 %v2778
    %v3042 = vunpack.c.l.b16 %v2779
    %v3043 = vunpack.c.l.b16 %v2780
    %v3044 = vunpack.c.l.b16 %v2781
    %v3045 = vunpack.c.l.b16 %v2782
    %v3046 = vunpack.c.l.b16 %v2783
    %v3047 = vunpack.c.l.b16 %v2784
    %v3048 = vunpack.c.l.b16 %v2785
    %v3049 = vunpack.c.l.b16 %v2786
    %v3050 = vunpack.c.l.b16 %v2787
    %v3051 = vunpack.c.l.b16 %v2788
    %v3052 = vunpack.c.l.b16 %v2789
    %v3053 = vunpack.c.l.b16 %v2790
    %v3054 = vunpack.c.l.b16 %v2791
    %v3055 = vunpack.c.l.b16 %v2792
    %v3056 = vunpack.c.l.b16 %v2793
    %v3057 = vunpack.c.l.b16 %v2794
    %v3058 = vunpack.c.l.b16 %v2795
    %v3059 = vunpack.c.l.b16 %v2796
    %v3060 = vunpack.c.l.b16 %v2797
    %v3061 = vunpack.c.l.b16 %v2798
    %v3062 = vunpack.c.l.b16 %v2799
    %v3063 = vunpack.c.l.b16 %v2800
    %v3064 = vunpack.c.l.b16 %v2801
    %v3065 = vunpack.c.l.b16 %v2802
    %v3066 = vunpack.c.l.b16 %v2803
    %v3067 = vunpack.c.l.b16 %v2804
    %v3068 = vunpack.c.l.b16 %v2805
    %v3069 = vunpack.c.l.b16 %v2806
    %v3070 = vunpack.c.l.b16 %v2807
    %v3071 = vunpack.c.l.b16 %v2808
    %v3072 = vunpack.c.l.b16 %v2809
    %v3073 = vunpack.c.l.b16 %v2810
    %v3074 = vunpack.c.l.b16 %v2811
    %v3075 = vunpack.c.l.b16 %v2812
    %v3076 = vunpack.c.l.b16 %v2813
    %v3077 = vunpack.c.l.b16 %v2814
    %v3078 = vunpack.c.l.b16 %v2815
    %v3079 = vunpack.c.l.b16 %v2816
    %v3080 = vunpack.c.l.b16 %v2817
    %v3081 = vunpack.c.l.b16 %v2818
    %v3082 = vunpack.c.l.b16 %v2819
    %v3083 = vunpack.c.l.b16 %v2820
    %v3084 = vunpack.c.l.b16 %v2821
    %v3085 = vunpack.c.l.b16 %v2822
    %v3086 = vunpack.c.l.b16 %v2823
    %v3087 = vunpack.c.l.b16 %v2824
    %v3088 = vunpack.c.l.b16 %v2825
    %v3089 = vunpack.c.l.b16 %v2826
    %v3090 = vpack.c.b16 %v2963, %v2962
    %v3091 = vpack.c.b16 %v2965, %v2964
    %v3092 = vpack.c.b16 %v2967, %v2966
    %v3093 = vpack.c.b16 %v2969, %v2968
    %v3094 = vpack.c.b16 %v2971, %v2970
    %v3095 = vpack.c.b16 %v2973, %v2972
    %v3096 = vpack.c.b16 %v2975, %v2974
    %v3097 = vpack.c.b16 %v2977, %v2976
    %v3098 = vpack.c.b16 %v2979, %v2978
    %v3099 = vpack.c.b16 %v2981, %v2980
    %v3100 = vpack.c.b16 %v2983, %v2982
    %v3101 = vpack.c.b16 %v2985, %v2984
    %v3102 = vpack.c.b16 %v2987, %v2986
    %v3103 = vpack.c.b16 %v2989, %v2988
    %v3104 = vpack.c.b16 %v2991, %v2990
    %v3105 = vpack.c.b16 %v2993, %v2992
    %v3106 = vpack.c.b16 %v2995, %v2994
    %v3107 = vpack.c.b16 %v2997, %v2996
    %v3108 = vpack.c.b16 %v2999, %v2998
    %v3109 = vpack.c.b16 %v3001, %v3000
    %v3110 = vpack.c.b16 %v3003, %v3002
    %v3111 = vpack.c.b16 %v3005, %v3004
    %v3112 = vpack.c.b16 %v3007, %v3006
    %v3113 = vpack.c.b16 %v3009, %v3008
    %v3114 = vpack.c.b16 %v3011, %v3010
    %v3115 = vpack.c.b16 %v3013, %v3012
    %v3116 = vpack.c.b16 %v3015, %v3014
    %v3117 = vpack.c.b16 %v3017, %v3016
    %v3118 = vpack.c.b16 %v3019, %v3018
    %v3119 = vpack.c.b16 %v3021, %v3020
    %v3120 = vpack.c.b16 %v3023, %v3022
    %v3121 = vpack.c.b16 %v3025, %v3024
    %v3122 = vpack.c.b16 %v3027, %v3026
    %v3123 = vpack.c.b16 %v3029, %v3028
    %v3124 = vpack.c.b16 %v3031, %v3030
    %v3125 = vpack.c.b16 %v3033, %v3032
    %v3126 = vpack.c.b16 %v3035, %v3034
    %v3127 = vpack.c.b16 %v3037, %v3036
    %v3128 = vpack.c.b16 %v3039, %v3038
    %v3129 = vpack.c.b16 %v3041, %v3040
    %v3130 = vpack.c.b16 %v3043, %v3042
    %v3131 = vpack.c.b16 %v3045, %v3044
    %v3132 = vpack.c.b16 %v3047, %v3046
    %v3133 = vpack.c.b16 %v3049, %v3048
    %v3134 = vpack.c.b16 %v3051, %v3050
    %v3135 = vpack.c.b16 %v3053, %v3052
    %v3136 = vpack.c.b16 %v3055, %v3054
    %v3137 = vpack.c.b16 %v3057, %v3056
    %v3138 = vpack.c.b16 %v3059, %v3058
    %v3139 = vpack.c.b16 %v3061, %v3060
    %v3140 = vpack.c.b16 %v3063, %v3062
    %v3141 = vpack.c.b16 %v3065, %v3064
    %v3142 = vpack.c.b16 %v3067, %v3066
    %v3143 = vpack.c.b16 %v3069, %v3068
    %v3144 = vpack.c.b16 %v3071, %v3070
    %v3145 = vpack.c.b16 %v3073, %v3072
    %v3146 = vpack.c.b16 %v3075, %v3074
    %v3147 = vpack.c.b16 %v3077, %v3076
    %v3148 = vpack.c.b16 %v3079, %v3078
    %v3149 = vpack.c.b16 %v3081, %v3080
    %v3150 = vpack.c.b16 %v3083, %v3082
    %v3151 = vpack.c.b16 %v3085, %v3084
    %v3152 = vpack.c.b16 %v3087, %v3086
    %v3153 = vpack.c.b16 %v3089, %v3088
    %3218 = vmatprep.subr.bf16.mxu0 0
    %3219 = vmatpush1.bf16.msra.mxu0 %v3097
    %3220 = vmatprep.subr.bf16.mxu0 0
    %3221 = vmatpush1.bf16.msra.mxu0 %v3096
    %3222 = vmatprep.subr.bf16.mxu0 0
    %3223 = vmatpush1.bf16.msra.mxu0 %v3095
    %3224 = vmatprep.subr.bf16.mxu0 0
    %3225 = vmatpush1.bf16.msra.mxu0 %v3094
    %3226 = vmatprep.subr.bf16.mxu0 0
    %3227 = vmatpush1.bf16.msra.mxu0 %v3093
    %3228 = vmatprep.subr.bf16.mxu0 0
    %3229 = vmatpush1.bf16.msra.mxu0 %v3092
    %3230 = vmatprep.subr.bf16.mxu0 0
    %3231 = vmatpush1.bf16.msra.mxu0 %v3091
    %3232 = vmatprep.subr.bf16.mxu0 0
    %3233 = vmatpush1.bf16.msra.mxu0 %v3090
    %3234 = vmatprep.subr.bf16.mxu0 0
    %3235 = vmatpush2.bf16.msra.mxu0 %v3105
    %3236 = vmatprep.subr.bf16.mxu0 0
    %3237 = vmatpush2.bf16.msra.mxu0 %v3104
    %3238 = vmatprep.subr.bf16.mxu0 0
    %3239 = vmatpush2.bf16.msra.mxu0 %v3103
    %3240 = vmatprep.subr.bf16.mxu0 0
    %3241 = vmatpush2.bf16.msra.mxu0 %v3102
    %3242 = vmatprep.subr.bf16.mxu0 0
    %3243 = vmatpush2.bf16.msra.mxu0 %v3101
    %3244 = vmatprep.subr.bf16.mxu0 0
    %3245 = vmatpush2.bf16.msra.mxu0 %v3100
    %3246 = vmatprep.subr.bf16.mxu0 0
    %3247 = vmatpush2.bf16.msra.mxu0 %v3099
    %3248 = vmatprep.subr.bf16.mxu0 0
    %3249 = vmatpush2.bf16.msra.mxu0 %v3098
    %3250 = vmatprep.mubr.bf16.mxu0 %v2692
    %3251 = vmatmul.mubr.bf16.gmra.mxu0 %v2691
    %v3252 = vpop.f32.mrf.mxu0
    %v3253 = vadd.f32 %v2832, %v3252
    %v3254 = vpop.f32.mrf.mxu0
    %v3255 = vpop.f32.mrf.mxu0
    %v3256 = vpop.f32.mrf.mxu0
    %3257 = vdwg.mxu0
    %3258 = vmatprep.subr.bf16.mxu0 0
    %3259 = vmatpush1.bf16.msra.mxu0 %v3113
    %3260 = vmatprep.subr.bf16.mxu0 0
    %3261 = vmatpush1.bf16.msra.mxu0 %v3112
    %3262 = vmatprep.subr.bf16.mxu0 0
    %3263 = vmatpush1.bf16.msra.mxu0 %v3111
    %3264 = vmatprep.subr.bf16.mxu0 0
    %3265 = vmatpush1.bf16.msra.mxu0 %v3110
    %3266 = vmatprep.subr.bf16.mxu0 0
    %3267 = vmatpush1.bf16.msra.mxu0 %v3109
    %3268 = vmatprep.subr.bf16.mxu0 0
    %3269 = vmatpush1.bf16.msra.mxu0 %v3108
    %3270 = vmatprep.subr.bf16.mxu0 0
    %3271 = vmatpush1.bf16.msra.mxu0 %v3107
    %3272 = vmatprep.subr.bf16.mxu0 0
    %3273 = vmatpush1.bf16.msra.mxu0 %v3106
    %3274 = vmatprep.subr.bf16.mxu0 0
    %3275 = vmatpush2.bf16.msra.mxu0 %v3121
    %3276 = vmatprep.subr.bf16.mxu0 0
    %3277 = vmatpush2.bf16.msra.mxu0 %v3120
    %3278 = vmatprep.subr.bf16.mxu0 0
    %3279 = vmatpush2.bf16.msra.mxu0 %v3119
    %3280 = vmatprep.subr.bf16.mxu0 0
    %3281 = vmatpush2.bf16.msra.mxu0 %v3118
    %3282 = vmatprep.subr.bf16.mxu0 0
    %3283 = vmatpush2.bf16.msra.mxu0 %v3117
    %3284 = vmatprep.subr.bf16.mxu0 0
    %3285 = vmatpush2.bf16.msra.mxu0 %v3116
    %3286 = vmatprep.subr.bf16.mxu0 0
    %3287 = vmatpush2.bf16.msra.mxu0 %v3115
    %3288 = vmatprep.subr.bf16.mxu0 0
    %3289 = vmatpush2.bf16.msra.mxu0 %v3114
    %3290 = vmatprep.mubr.bf16.mxu0 %v2694
    %3291 = vmatmul.mubr.bf16.gmra.mxu0 %v2693
    %v3292 = vpop.f32.mrf.mxu0
    %v3293 = vadd.f32 %v3253, %v3292
    %v3294 = vpop.f32.mrf.mxu0
    %v3295 = vpop.f32.mrf.mxu0
    %v3296 = vpop.f32.mrf.mxu0
    %3297 = vdwg.mxu0
    %3298 = vmatprep.subr.bf16.mxu0 0
    %3299 = vmatpush1.bf16.msra.mxu0 %v3129
    %3300 = vmatprep.subr.bf16.mxu0 0
    %3301 = vmatpush1.bf16.msra.mxu0 %v3128
    %3302 = vmatprep.subr.bf16.mxu0 0
    %3303 = vmatpush1.bf16.msra.mxu0 %v3127
    %3304 = vmatprep.subr.bf16.mxu0 0
    %3305 = vmatpush1.bf16.msra.mxu0 %v3126
    %3306 = vmatprep.subr.bf16.mxu0 0
    %3307 = vmatpush1.bf16.msra.mxu0 %v3125
    %3308 = vmatprep.subr.bf16.mxu0 0
    %3309 = vmatpush1.bf16.msra.mxu0 %v3124
    %3310 = vmatprep.subr.bf16.mxu0 0
    %3311 = vmatpush1.bf16.msra.mxu0 %v3123
    %3312 = vmatprep.subr.bf16.mxu0 0
    %3313 = vmatpush1.bf16.msra.mxu0 %v3122
    %3314 = vmatprep.subr.bf16.mxu0 0
    %3315 = vmatpush2.bf16.msra.mxu0 %v3137
    %3316 = vmatprep.subr.bf16.mxu0 0
    %3317 = vmatpush2.bf16.msra.mxu0 %v3136
    %3318 = vmatprep.subr.bf16.mxu0 0
    %3319 = vmatpush2.bf16.msra.mxu0 %v3135
    %3320 = vmatprep.subr.bf16.mxu0 0
    %3321 = vmatpush2.bf16.msra.mxu0 %v3134
    %3322 = vmatprep.subr.bf16.mxu0 0
    %3323 = vmatpush2.bf16.msra.mxu0 %v3133
    %3324 = vmatprep.subr.bf16.mxu0 0
    %3325 = vmatpush2.bf16.msra.mxu0 %v3132
    %3326 = vmatprep.subr.bf16.mxu0 0
    %3327 = vmatpush2.bf16.msra.mxu0 %v3131
    %3328 = vmatprep.subr.bf16.mxu0 0
    %3329 = vmatpush2.bf16.msra.mxu0 %v3130
    %3330 = vmatprep.mubr.bf16.mxu0 %v2696
    %3331 = vmatmul.mubr.bf16.gmra.mxu0 %v2695
    %v3332 = vpop.f32.mrf.mxu0
    %v3333 = vadd.f32 %v3293, %v3332
    %v3334 = vpop.f32.mrf.mxu0
    %v3335 = vpop.f32.mrf.mxu0
    %v3336 = vpop.f32.mrf.mxu0
    %3337 = vdwg.mxu0
    %3338 = vmatprep.subr.bf16.mxu0 0
    %3339 = vmatpush1.bf16.msra.mxu0 %v3145
    %3340 = vmatprep.subr.bf16.mxu0 0
    %3341 = vmatpush1.bf16.msra.mxu0 %v3144
    %3342 = vmatprep.subr.bf16.mxu0 0
    %3343 = vmatpush1.bf16.msra.mxu0 %v3143
    %3344 = vmatprep.subr.bf16.mxu0 0
    %3345 = vmatpush1.bf16.msra.mxu0 %v3142
    %3346 = vmatprep.subr.bf16.mxu0 0
    %3347 = vmatpush1.bf16.msra.mxu0 %v3141
    %3348 = vmatprep.subr.bf16.mxu0 0
    %3349 = vmatpush1.bf16.msra.mxu0 %v3140
    %3350 = vmatprep.subr.bf16.mxu0 0
    %3351 = vmatpush1.bf16.msra.mxu0 %v3139
    %3352 = vmatprep.subr.bf16.mxu0 0
    %3353 = vmatpush1.bf16.msra.mxu0 %v3138
    %3354 = vmatprep.subr.bf16.mxu0 0
    %3355 = vmatpush2.bf16.msra.mxu0 %v3153
    %3356 = vmatprep.subr.bf16.mxu0 0
    %3357 = vmatpush2.bf16.msra.mxu0 %v3152
    %3358 = vmatprep.subr.bf16.mxu0 0
    %3359 = vmatpush2.bf16.msra.mxu0 %v3151
    %3360 = vmatprep.subr.bf16.mxu0 0
    %3361 = vmatpush2.bf16.msra.mxu0 %v3150
    %3362 = vmatprep.subr.bf16.mxu0 0
    %3363 = vmatpush2.bf16.msra.mxu0 %v3149
    %3364 = vmatprep.subr.bf16.mxu0 0
    %3365 = vmatpush2.bf16.msra.mxu0 %v3148
    %3366 = vmatprep.subr.bf16.mxu0 0
    %3367 = vmatpush2.bf16.msra.mxu0 %v3147
    %3368 = vmatprep.subr.bf16.mxu0 0
    %3369 = vmatpush2.bf16.msra.mxu0 %v3146
    %3370 = vmatprep.mubr.bf16.mxu0 %v2698
    %3371 = vmatmul.mubr.bf16.gmra.mxu0 %v2697
    %v3372 = vpop.f32.mrf.mxu0
    %v3373 = vadd.f32 %v3333, %v3372
    %v3374 = vpop.f32.mrf.mxu0
    %v3375 = vpop.f32.mrf.mxu0
    %v3376 = vpop.f32.mrf.mxu0
    %3377 = vdwg.mxu0
    %v3378 = vtanh.pop %v3373
    %3379 = vst [vmem:[#allocation13] sm:$0xff] %v3378
    // Predicated region
    $region62: #{tpu_custom_call.1} parent=1 // pred_check
      _
    $region63: #{tpu_custom_call.1} parent=1 // pred_check_branch
      %3381 = sbr.rel (0) target = $region65
    $region64: #{tpu_custom_call.1} parent=1 // pred_region
      %s3383 = ssub.s32 128, 128
      %3384 = vsyncadd [#allocation4], %s3383
      %s3386 = sshll.u32 [#allocation13], 4
      %s3387 = int_to_ptr.vmem [resolvable:$true] %s3386
      %3389 = dma.vmem_to_hbm [thread:$0]  %s3387, 128, %s9, [#allocation4]
    $region65: #{tpu_custom_call.1} parent=1 // pred_fallthru
      _
    // Predicated region
    $region66: #{tpu_custom_call.1} parent=1 // pred_check
      _
    $region67: #{tpu_custom_call.1} parent=1 // pred_check_branch
      %3391 = sbr.rel (0) target = $region69
    $region68: #{tpu_custom_call.1} parent=1 // pred_region
      %3392 = dma.done [#allocation4], 128
    $region69: #{tpu_custom_call.1} parent=1 // pred_fallthru
      _
    %3393 = vsyncpa [#allocation3], 1
    %3394 = vsyncpa [#allocation6], 1
    %3395 = vsyncpa [#allocation9], 1
    %3396 = vsyncpa [#allocation12], 1
    %3397 = vsyncpa [#allocation4], 1

</llo_original>
